<compile_context>
chip_gen: v6e
topology: v6e:2x2x1
jax: 0.10.0
libtpu: 0.0.40
codegen_flags: <defaults>
</compile_context>

<pallas_src>
import jax
import jax.numpy as jnp
from jax import lax
from jax.experimental import pallas as pl
from jax.experimental.pallas import tpu as pltpu

EPS = 1e-5


# ---------------------------------------------------------------------------
# Kernel
# ---------------------------------------------------------------------------
def double_conv_kernel(x_ref, d_ref, wb1_ref, g1_ref, b1_ref, p1_ref,
                       wb2_ref, g2_ref, b2_ref, p2_ref, o_ref):
    """Fused (conv3x3 -> BN -> ReLU) x 2, everything in (N*H, W*C) lane layout.

    x_ref  : (R, W*Cin)        R = N*H rows, lane = w*Cin + ci
    d_ref  : (2, R, R)         image-aware row-shift operators (dy=-1, dy=+1)
    wb1_ref: (3, W*Cin, W*Cmid) block-banded conv1 weights, one per kernel row
    g1/b1  : (1, W*Cmid)       gamma/beta pre-broadcast to the fused lane layout
    p1_ref : (W*Cmid, W*Cmid)  channel-match matrix, pre-scaled by 1/(N*H*W)
    wb2_ref: (3, W*Cmid, W*Cout)
    g2/b2  : (1, W*Cout)
    p2_ref : (W*Cout, W*Cout)
    o_ref  : (R, W*Cout)       lane-dense output (128 lanes for the test shape)
    """
    x = x_ref[...]
    d_up = d_ref[0]          # tap dy = -1 (zero at h == 0, no cross-image leak)
    d_dn = d_ref[1]          # tap dy = +1 (zero at h == H-1)

    def conv3x3(v, wb_ref):
        # 3 banded matmuls (one per kernel row) + 2 tiny row-shift matmuls.
        acc = jnp.dot(v, wb_ref[1], preferred_element_type=jnp.float32)
        acc += jnp.dot(jnp.dot(d_up, v, preferred_element_type=jnp.float32),
                       wb_ref[0], preferred_element_type=jnp.float32)
        acc += jnp.dot(jnp.dot(d_dn, v, preferred_element_type=jnp.float32),
                       wb_ref[2], preferred_element_type=jnp.float32)
        return acc

    def bn_relu(acc, gf, bf, p):
        # Train-mode BN (biased variance, two-pass / centered) + ReLU.
        # p already contains the 1/(N*H*W) factor; rowsum @ p broadcasts the
        # per-channel statistic back to every (w, c) lane position.
        mean_f = jnp.dot(jnp.sum(acc, axis=0, keepdims=True), p,
                         preferred_element_type=jnp.float32)
        centered = acc - mean_f
        var_f = jnp.dot(jnp.sum(centered * centered, axis=0, keepdims=True), p,
                        preferred_element_type=jnp.float32)
        scale_f = gf * lax.rsqrt(var_f + EPS)
        return jnp.maximum(centered * scale_f + bf, 0.0)

    h1 = bn_relu(conv3x3(x, wb1_ref), g1_ref[...], b1_ref[...], p1_ref[...])
    y = bn_relu(conv3x3(h1, wb2_ref), g2_ref[...], b2_ref[...], p2_ref[...])
    o_ref[...] = y.astype(o_ref.dtype)


# ---------------------------------------------------------------------------
# Constant-operator construction (plain JAX, once per call, outside the kernel)
# ---------------------------------------------------------------------------
def _band_weights(w_hwio, W):
    """HWIO (3,3,Cin,Cout) -> (3, W*Cin, W*Cout) block-banded per-row matrices.

    Row-ky matrix applies the 3 horizontal taps of kernel row ky as ONE
    lane-fused matmul; dx shift and W-border zero padding live in the band
    structure: M[(w+dx)*Cin+ci, w*Cout+co] = w_hwio[ky, dx+1, ci, co].
    """
    _, _, Cin, Cout = w_hwio.shape
    mats = []
    for ky in range(3):
        m = jnp.zeros((W * Cin, W * Cout), jnp.float32)
        for kx in range(3):
            shift = jnp.eye(W, k=-(kx - 1), dtype=jnp.float32)
            m = m + jnp.kron(shift, w_hwio[ky, kx].astype(jnp.float32))
        mats.append(m)
    return jnp.stack(mats)


def _row_shift_mats(N, H):
    """(2, N*H, N*H) operators: +/-1 image-row shift, zero at image borders."""
    eye_n = jnp.eye(N, dtype=jnp.float32)
    up = jnp.kron(eye_n, jnp.eye(H, k=-1, dtype=jnp.float32))   # tap dy = -1
    dn = jnp.kron(eye_n, jnp.eye(H, k=+1, dtype=jnp.float32))   # tap dy = +1
    return jnp.stack([up, dn])


def _chan_match_mat(C, W, m):
    """(W*C, W*C): per-channel lane sum + broadcast back, pre-scaled by 1/m."""
    return jnp.kron(jnp.ones((W, W), jnp.float32),
                    jnp.eye(C, dtype=jnp.float32)) / m


def _fuse_lane(v, C, W):
    """Per-channel (C,) vector -> (1, W*C) fused-lane broadcast."""
    return jnp.tile(v.reshape(1, C).astype(jnp.float32), (1, W))


# ---------------------------------------------------------------------------
# Wrapper: NCHW in / NCHW out; layout glue stays at the JAX boundary.
# ---------------------------------------------------------------------------
def double_conv(x_nchw, w1_hwio, gamma1, beta1, w2_hwio, gamma2, beta2):
    N, Cin, H, W = x_nchw.shape
    Cmid = w1_hwio.shape[-1]
    Cout = w2_hwio.shape[-1]
    R, M = N * H, N * H * W

    # NHWC then fuse W into the lane axis -> (N*H, W*Cin).
    x2d = jnp.transpose(x_nchw, (0, 2, 3, 1)).astype(jnp.float32)
    x2d = x2d.reshape(R, W * Cin)

    d = _row_shift_mats(N, H)
    wb1 = _band_weights(w1_hwio, W)
    wb2 = _band_weights(w2_hwio, W)
    p1 = _chan_match_mat(Cmid, W, M)
    p2 = _chan_match_mat(Cout, W, M)
    gf1 = _fuse_lane(gamma1, Cmid, W)
    bf1 = _fuse_lane(beta1, Cmid, W)
    gf2 = _fuse_lane(gamma2, Cout, W)
    bf2 = _fuse_lane(beta2, Cout, W)

    vmem = pl.BlockSpec(memory_space=pltpu.MemorySpace.VMEM)
    out2d = pl.pallas_call(
        double_conv_kernel,
        out_shape=jax.ShapeDtypeStruct((R, W * Cout), jnp.float32),
        in_specs=[vmem] * 10,
        out_specs=vmem,
        compiler_params=pltpu.CompilerParams(
            vmem_limit_bytes=64 * 1024 * 1024),
    )(x2d, d, wb1, gf1, bf1, p1, wb2, gf2, bf2, p2)

    out = out2d.reshape(N, H, W, Cout)
    return jnp.transpose(out, (0, 3, 1, 2))                       # NCHW


# ---------------------------------------------------------------------------
# Pure-JAX reference (lax.conv + train-mode BN + ReLU), NCHW in/out.
# ---------------------------------------------------------------------------
def _reference(x_nchw, w1_hwio, gamma1, beta1, w2_hwio, gamma2, beta2):
    def block(x_nhwc, w_hwio, g, b):
        y = lax.conv_general_dilated(
            x_nhwc, w_hwio, window_strides=(1, 1), padding='SAME',
            dimension_numbers=('NHWC', 'HWIO', 'NHWC'))
        mean = jnp.mean(y, axis=(0, 1, 2), keepdims=True)
        var = jnp.mean((y - mean) ** 2, axis=(0, 1, 2), keepdims=True)
        y = (y - mean) * lax.rsqrt(var + EPS) * g.reshape(1, 1, 1, -1) \
            + b.reshape(1, 1, 1, -1)
        return jnp.maximum(y, 0.0)

    x = jnp.transpose(x_nchw, (0, 2, 3, 1)).astype(jnp.float32)
    h = block(x, w1_hwio, gamma1, beta1)
    y = block(h, w2_hwio, gamma2, beta2)
    return jnp.transpose(y, (0, 3, 1, 2))


if __name__ == "__main__":
    # Small shapes consistent with DoubleConv(in_channels=4, out_channels=8)
    N, Cin, H, W = 2, 4, 16, 16
    Cmid = Cout = 8

    key = jax.random.PRNGKey(0)
    kx, kw1, kw2 = jax.random.split(key, 3)

    x = jax.random.normal(kx, (N, Cin, H, W), jnp.float32)
    # Conv weights in HWIO layout (3, 3, Cin, Cout); equivalent to PyTorch
    # OIHW weights transposed — synthetic deterministic init (bias=False).
    w1 = jax.random.normal(kw1, (3, 3, Cin, Cmid), jnp.float32) * 0.2
    w2 = jax.random.normal(kw2, (3, 3, Cmid, Cout), jnp.float32) * 0.2
    gamma1 = 1.0 + 0.1 * jnp.arange(Cmid, dtype=jnp.float32)
    beta1 = 0.05 * jnp.arange(Cmid, dtype=jnp.float32)
    gamma2 = 1.0 - 0.05 * jnp.arange(Cout, dtype=jnp.float32)
    beta2 = -0.02 * jnp.arange(Cout, dtype=jnp.float32)

    out = jax.jit(double_conv)(x, w1, gamma1, beta1, w2, gamma2, beta2)
    out = jax.block_until_ready(out)

    ref = _reference(x, w1, gamma1, beta1, w2, gamma2, beta2)
    assert out.shape == (N, Cout, H, W)
    assert jnp.allclose(out, ref, atol=1e-4, rtol=1e-4)

    print("KERNEL_OK")
</pallas_src>

<mosaic_0001>
module attributes {stable_mosaic.version = 11 : i64} {
  func.func @double_conv_kernel(%arg0: memref<32x64xf32, #tpu.memory_space<vmem>>, %arg1: memref<2x32x32xf32, #tpu.memory_space<vmem>>, %arg2: memref<3x64x128xf32, #tpu.memory_space<vmem>>, %arg3: memref<1x128xf32, #tpu.memory_space<vmem>>, %arg4: memref<1x128xf32, #tpu.memory_space<vmem>>, %arg5: memref<128x128xf32, #tpu.memory_space<vmem>>, %arg6: memref<3x128x128xf32, #tpu.memory_space<vmem>>, %arg7: memref<1x128xf32, #tpu.memory_space<vmem>>, %arg8: memref<1x128xf32, #tpu.memory_space<vmem>>, %arg9: memref<128x128xf32, #tpu.memory_space<vmem>>, %arg10: memref<32x128xf32, #tpu.memory_space<vmem>>) attributes {dimension_semantics = [], scalar_prefetch = 0 : i64, scratch_operands = 0 : i64, tpu.core_type = #tpu.core_type<tc>} {
    %c0 = arith.constant 0 : index
    %c0_0 = arith.constant 0 : index
    %0 = vector.load %arg0[%c0, %c0_0] : memref<32x64xf32, #tpu.memory_space<vmem>>, vector<32x64xf32>
    %c0_1 = arith.constant 0 : index
    %c0_2 = arith.constant 0 : index
    %c0_3 = arith.constant 0 : index
    %1 = vector.load %arg1[%c0_1, %c0_2, %c0_3] : memref<2x32x32xf32, #tpu.memory_space<vmem>>, vector<1x32x32xf32>
    %2 = vector.shape_cast %1 : vector<1x32x32xf32> to vector<32x32xf32>
    %c1 = arith.constant 1 : index
    %c0_4 = arith.constant 0 : index
    %c0_5 = arith.constant 0 : index
    %3 = vector.load %arg1[%c1, %c0_4, %c0_5] : memref<2x32x32xf32, #tpu.memory_space<vmem>>, vector<1x32x32xf32>
    %4 = vector.shape_cast %3 : vector<1x32x32xf32> to vector<32x32xf32>
    %c1_6 = arith.constant 1 : index
    %c0_7 = arith.constant 0 : index
    %c0_8 = arith.constant 0 : index
    %5 = vector.load %arg2[%c1_6, %c0_7, %c0_8] : memref<3x64x128xf32, #tpu.memory_space<vmem>>, vector<1x64x128xf32>
    %6 = vector.shape_cast %5 : vector<1x64x128xf32> to vector<64x128xf32>
    %cst = arith.constant dense<0.000000e+00> : vector<32x128xf32>
    %7 = tpu.matmul %0, %6, %cst {dimension_numbers = #tpu.dot_dimension_numbers<[1], [0], [0], [1], [0, 0, 1, 1], [], []>} : vector<32x64xf32>, vector<64x128xf32>, vector<32x128xf32> -> vector<32x128xf32>
    %cst_9 = arith.constant dense<0.000000e+00> : vector<32x64xf32>
    %8 = tpu.matmul %2, %0, %cst_9 {dimension_numbers = #tpu.dot_dimension_numbers<[1], [0], [0], [1], [0, 0, 1, 1], [], []>} : vector<32x32xf32>, vector<32x64xf32>, vector<32x64xf32> -> vector<32x64xf32>
    %c0_10 = arith.constant 0 : index
    %c0_11 = arith.constant 0 : index
    %c0_12 = arith.constant 0 : index
    %9 = vector.load %arg2[%c0_10, %c0_11, %c0_12] : memref<3x64x128xf32, #tpu.memory_space<vmem>>, vector<1x64x128xf32>
    %10 = vector.shape_cast %9 : vector<1x64x128xf32> to vector<64x128xf32>
    %cst_13 = arith.constant dense<0.000000e+00> : vector<32x128xf32>
    %11 = tpu.matmul %8, %10, %cst_13 {dimension_numbers = #tpu.dot_dimension_numbers<[1], [0], [0], [1], [0, 0, 1, 1], [], []>} : vector<32x64xf32>, vector<64x128xf32>, vector<32x128xf32> -> vector<32x128xf32>
    %12 = arith.addf %7, %11 : vector<32x128xf32>
    %cst_14 = arith.constant dense<0.000000e+00> : vector<32x64xf32>
    %13 = tpu.matmul %4, %0, %cst_14 {dimension_numbers = #tpu.dot_dimension_numbers<[1], [0], [0], [1], [0, 0, 1, 1], [], []>} : vector<32x32xf32>, vector<32x64xf32>, vector<32x64xf32> -> vector<32x64xf32>
    %c2 = arith.constant 2 : index
    %c0_15 = arith.constant 0 : index
    %c0_16 = arith.constant 0 : index
    %14 = vector.load %arg2[%c2, %c0_15, %c0_16] : memref<3x64x128xf32, #tpu.memory_space<vmem>>, vector<1x64x128xf32>
    %15 = vector.shape_cast %14 : vector<1x64x128xf32> to vector<64x128xf32>
    %cst_17 = arith.constant dense<0.000000e+00> : vector<32x128xf32>
    %16 = tpu.matmul %13, %15, %cst_17 {dimension_numbers = #tpu.dot_dimension_numbers<[1], [0], [0], [1], [0, 0, 1, 1], [], []>} : vector<32x64xf32>, vector<64x128xf32>, vector<32x128xf32> -> vector<32x128xf32>
    %17 = arith.addf %12, %16 : vector<32x128xf32>
    %c0_18 = arith.constant 0 : index
    %c0_19 = arith.constant 0 : index
    %18 = vector.load %arg3[%c0_18, %c0_19] : memref<1x128xf32, #tpu.memory_space<vmem>>, vector<1x128xf32>
    %c0_20 = arith.constant 0 : index
    %c0_21 = arith.constant 0 : index
    %19 = vector.load %arg4[%c0_20, %c0_21] : memref<1x128xf32, #tpu.memory_space<vmem>>, vector<1x128xf32>
    %c0_22 = arith.constant 0 : index
    %c0_23 = arith.constant 0 : index
    %20 = vector.load %arg5[%c0_22, %c0_23] : memref<128x128xf32, #tpu.memory_space<vmem>>, vector<128x128xf32>
    %cst_24 = arith.constant dense<0.000000e+00> : vector<128xf32>
    %21 = vector.multi_reduction <add>, %17, %cst_24 [0] : vector<32x128xf32> to vector<128xf32>
    %22 = vector.shape_cast %21 : vector<128xf32> to vector<1x128xf32>
    %cst_25 = arith.constant dense<0.000000e+00> : vector<1x128xf32>
    %23 = tpu.matmul %22, %20, %cst_25 {dimension_numbers = #tpu.dot_dimension_numbers<[1], [0], [0], [1], [0, 0, 1, 1], [], []>} : vector<1x128xf32>, vector<128x128xf32>, vector<1x128xf32> -> vector<1x128xf32>
    %24 = vector.broadcast %23 : vector<1x128xf32> to vector<32x128xf32>
    %25 = arith.subf %17, %24 : vector<32x128xf32>
    %26 = arith.mulf %25, %25 : vector<32x128xf32>
    %cst_26 = arith.constant dense<0.000000e+00> : vector<128xf32>
    %27 = vector.multi_reduction <add>, %26, %cst_26 [0] : vector<32x128xf32> to vector<128xf32>
    %28 = vector.shape_cast %27 : vector<128xf32> to vector<1x128xf32>
    %cst_27 = arith.constant dense<0.000000e+00> : vector<1x128xf32>
    %29 = tpu.matmul %28, %20, %cst_27 {dimension_numbers = #tpu.dot_dimension_numbers<[1], [0], [0], [1], [0, 0, 1, 1], [], []>} : vector<1x128xf32>, vector<128x128xf32>, vector<1x128xf32> -> vector<1x128xf32>
    %cst_28 = arith.constant 9.99999974E-6 : f32
    %30 = vector.broadcast %cst_28 : f32 to vector<1x128xf32>
    %31 = arith.addf %29, %30 : vector<1x128xf32>
    %32 = math.rsqrt %31 : vector<1x128xf32>
    %33 = arith.mulf %18, %32 : vector<1x128xf32>
    %34 = vector.broadcast %33 : vector<1x128xf32> to vector<32x128xf32>
    %35 = arith.mulf %25, %34 : vector<32x128xf32>
    %36 = vector.broadcast %19 : vector<1x128xf32> to vector<32x128xf32>
    %37 = arith.addf %35, %36 : vector<32x128xf32>
    %cst_29 = arith.constant 0.000000e+00 : f32
    %38 = vector.broadcast %cst_29 : f32 to vector<32x128xf32>
    %39 = arith.maximumf %37, %38 : vector<32x128xf32>
    %c1_30 = arith.constant 1 : index
    %c0_31 = arith.constant 0 : index
    %c0_32 = arith.constant 0 : index
    %40 = vector.load %arg6[%c1_30, %c0_31, %c0_32] : memref<3x128x128xf32, #tpu.memory_space<vmem>>, vector<1x128x128xf32>
    %41 = vector.shape_cast %40 : vector<1x128x128xf32> to vector<128x128xf32>
    %cst_33 = arith.constant dense<0.000000e+00> : vector<32x128xf32>
    %42 = tpu.matmul %39, %41, %cst_33 {dimension_numbers = #tpu.dot_dimension_numbers<[1], [0], [0], [1], [0, 0, 1, 1], [], []>} : vector<32x128xf32>, vector<128x128xf32>, vector<32x128xf32> -> vector<32x128xf32>
    %cst_34 = arith.constant dense<0.000000e+00> : vector<32x128xf32>
    %43 = tpu.matmul %2, %39, %cst_34 {dimension_numbers = #tpu.dot_dimension_numbers<[1], [0], [0], [1], [0, 0, 1, 1], [], []>} : vector<32x32xf32>, vector<32x128xf32>, vector<32x128xf32> -> vector<32x128xf32>
    %c0_35 = arith.constant 0 : index
    %c0_36 = arith.constant 0 : index
    %c0_37 = arith.constant 0 : index
    %44 = vector.load %arg6[%c0_35, %c0_36, %c0_37] : memref<3x128x128xf32, #tpu.memory_space<vmem>>, vector<1x128x128xf32>
    %45 = vector.shape_cast %44 : vector<1x128x128xf32> to vector<128x128xf32>
    %cst_38 = arith.constant dense<0.000000e+00> : vector<32x128xf32>
    %46 = tpu.matmul %43, %45, %cst_38 {dimension_numbers = #tpu.dot_dimension_numbers<[1], [0], [0], [1], [0, 0, 1, 1], [], []>} : vector<32x128xf32>, vector<128x128xf32>, vector<32x128xf32> -> vector<32x128xf32>
    %47 = arith.addf %42, %46 : vector<32x128xf32>
    %cst_39 = arith.constant dense<0.000000e+00> : vector<32x128xf32>
    %48 = tpu.matmul %4, %39, %cst_39 {dimension_numbers = #tpu.dot_dimension_numbers<[1], [0], [0], [1], [0, 0, 1, 1], [], []>} : vector<32x32xf32>, vector<32x128xf32>, vector<32x128xf32> -> vector<32x128xf32>
    %c2_40 = arith.constant 2 : index
    %c0_41 = arith.constant 0 : index
    %c0_42 = arith.constant 0 : index
    %49 = vector.load %arg6[%c2_40, %c0_41, %c0_42] : memref<3x128x128xf32, #tpu.memory_space<vmem>>, vector<1x128x128xf32>
    %50 = vector.shape_cast %49 : vector<1x128x128xf32> to vector<128x128xf32>
    %cst_43 = arith.constant dense<0.000000e+00> : vector<32x128xf32>
    %51 = tpu.matmul %48, %50, %cst_43 {dimension_numbers = #tpu.dot_dimension_numbers<[1], [0], [0], [1], [0, 0, 1, 1], [], []>} : vector<32x128xf32>, vector<128x128xf32>, vector<32x128xf32> -> vector<32x128xf32>
    %52 = arith.addf %47, %51 : vector<32x128xf32>
    %c0_44 = arith.constant 0 : index
    %c0_45 = arith.constant 0 : index
    %53 = vector.load %arg7[%c0_44, %c0_45] : memref<1x128xf32, #tpu.memory_space<vmem>>, vector<1x128xf32>
    %c0_46 = arith.constant 0 : index
    %c0_47 = arith.constant 0 : index
    %54 = vector.load %arg8[%c0_46, %c0_47] : memref<1x128xf32, #tpu.memory_space<vmem>>, vector<1x128xf32>
    %c0_48 = arith.constant 0 : index
    %c0_49 = arith.constant 0 : index
    %55 = vector.load %arg9[%c0_48, %c0_49] : memref<128x128xf32, #tpu.memory_space<vmem>>, vector<128x128xf32>
    %cst_50 = arith.constant dense<0.000000e+00> : vector<128xf32>
    %56 = vector.multi_reduction <add>, %52, %cst_50 [0] : vector<32x128xf32> to vector<128xf32>
    %57 = vector.shape_cast %56 : vector<128xf32> to vector<1x128xf32>
    %cst_51 = arith.constant dense<0.000000e+00> : vector<1x128xf32>
    %58 = tpu.matmul %57, %55, %cst_51 {dimension_numbers = #tpu.dot_dimension_numbers<[1], [0], [0], [1], [0, 0, 1, 1], [], []>} : vector<1x128xf32>, vector<128x128xf32>, vector<1x128xf32> -> vector<1x128xf32>
    %59 = vector.broadcast %58 : vector<1x128xf32> to vector<32x128xf32>
    %60 = arith.subf %52, %59 : vector<32x128xf32>
    %61 = arith.mulf %60, %60 : vector<32x128xf32>
    %cst_52 = arith.constant dense<0.000000e+00> : vector<128xf32>
    %62 = vector.multi_reduction <add>, %61, %cst_52 [0] : vector<32x128xf32> to vector<128xf32>
    %63 = vector.shape_cast %62 : vector<128xf32> to vector<1x128xf32>
    %cst_53 = arith.constant dense<0.000000e+00> : vector<1x128xf32>
    %64 = tpu.matmul %63, %55, %cst_53 {dimension_numbers = #tpu.dot_dimension_numbers<[1], [0], [0], [1], [0, 0, 1, 1], [], []>} : vector<1x128xf32>, vector<128x128xf32>, vector<1x128xf32> -> vector<1x128xf32>
    %cst_54 = arith.constant 9.99999974E-6 : f32
    %65 = vector.broadcast %cst_54 : f32 to vector<1x128xf32>
    %66 = arith.addf %64, %65 : vector<1x128xf32>
    %67 = math.rsqrt %66 : vector<1x128xf32>
    %68 = arith.mulf %53, %67 : vector<1x128xf32>
    %69 = vector.broadcast %68 : vector<1x128xf32> to vector<32x128xf32>
    %70 = arith.mulf %60, %69 : vector<32x128xf32>
    %71 = vector.broadcast %54 : vector<1x128xf32> to vector<32x128xf32>
    %72 = arith.addf %70, %71 : vector<32x128xf32>
    %cst_55 = arith.constant 0.000000e+00 : f32
    %73 = vector.broadcast %cst_55 : f32 to vector<32x128xf32>
    %74 = arith.maximumf %72, %73 : vector<32x128xf32>
    %c0_56 = arith.constant 0 : index
    %c0_57 = arith.constant 0 : index
    %75 = vector.load %arg10[%c0_56, %c0_57] : memref<32x128xf32, #tpu.memory_space<vmem>>, vector<32x128xf32>
    tpu.vector_store %arg10[%c0_56, %c0_57], %74 {strides = array<i32>} : memref<32x128xf32, #tpu.memory_space<vmem>>, vector<32x128xf32>,
    return
  }
}

</mosaic_0001>

<llo_original>
// kernel: double_conv.1
$region0: #{double_conv.1}
  #allocation0 [shape = 'u32[]', space=smem, size = 0x4, offset = 0x4, fixed_abs, tag = 'smem constant byte address 0x4 - core index']
  #allocation1 [shape = 'u32[144,128]{1,0:T(1,128)}', space=vmem, size = 0x12000, scoped, tag = 'internal scratch']
  %s0 = inlined_call_operand.vmem [shape: f32[32,64], index: 0, kind: input, shape index: {}]
  %s1 = inlined_call_operand.vmem [shape: f32[2,32,32], index: 1, kind: input, shape index: {}]
  %s2 = inlined_call_operand.vmem [shape: f32[3,64,128], index: 2, kind: input, shape index: {}]
  %s3 = inlined_call_operand.vmem [shape: f32[1,128], index: 3, kind: input, shape index: {}]
  %s4 = inlined_call_operand.vmem [shape: f32[1,128], index: 4, kind: input, shape index: {}]
  %s5 = inlined_call_operand.vmem [shape: f32[128,128], index: 5, kind: input, shape index: {}, may-alias: {5,9}]
  %s6 = inlined_call_operand.vmem [shape: f32[3,128,128], index: 6, kind: input, shape index: {}]
  %s7 = inlined_call_operand.vmem [shape: f32[1,128], index: 7, kind: input, shape index: {}]
  %s8 = inlined_call_operand.vmem [shape: f32[1,128], index: 8, kind: input, shape index: {}]
  %s9 = inlined_call_operand.vmem [shape: f32[128,128], index: 9, kind: input, shape index: {}, may-alias: {5,9}]
  %s10 = inlined_call_operand.vmem [shape: f32[32,128], index: 10, kind: output, shape index: {}]
  %s11 = sld [smem:[#allocation0]]
  $region50: #{double_conv.1} parent=0
    _
  %s13 = ssub.s32 1, %s11
  %s14 = scalar_select 0, %s13, %s11
  // Predicated region
  $region2: #{double_conv.1} parent=0 // pred_check
    _
  $region3: #{double_conv.1} parent=0 // pred_check_branch
    %16 = sbr.rel (0) target = $region5
  $region4: #{double_conv.1} parent=0 // pred_region
    _
  $region5: #{double_conv.1} parent=0 // pred_fallthru
    _
  // Predicated region
  $region6: #{double_conv.1} parent=0 // pred_check
    _
  $region7: #{double_conv.1} parent=0 // pred_check_branch
    %18 = sbr.rel (0) target = $region9
  $region8: #{double_conv.1} parent=0 // pred_region
    _
  $region9: #{double_conv.1} parent=0 // pred_fallthru
    _
  // Predicated region
  $region10: #{double_conv.1} parent=0 // pred_check
    _
  $region11: #{double_conv.1} parent=0 // pred_check_branch
    %20 = sbr.rel (0) target = $region13
  $region12: #{double_conv.1} parent=0 // pred_region
    _
  $region13: #{double_conv.1} parent=0 // pred_fallthru
    _
  // Predicated region
  $region14: #{double_conv.1} parent=0 // pred_check
    _
  $region15: #{double_conv.1} parent=0 // pred_check_branch
    %22 = sbr.rel (0) target = $region17
  $region16: #{double_conv.1} parent=0 // pred_region
    _
  $region17: #{double_conv.1} parent=0 // pred_fallthru
    _
  // Predicated region
  $region18: #{double_conv.1} parent=0 // pred_check
    _
  $region19: #{double_conv.1} parent=0 // pred_check_branch
    %24 = sbr.rel (0) target = $region21
  $region20: #{double_conv.1} parent=0 // pred_region
    _
  $region21: #{double_conv.1} parent=0 // pred_fallthru
    _
  // Predicated region
  $region22: #{double_conv.1} parent=0 // pred_check
    _
  $region23: #{double_conv.1} parent=0 // pred_check_branch
    %26 = sbr.rel (0) target = $region25
  $region24: #{double_conv.1} parent=0 // pred_region
    _
  $region25: #{double_conv.1} parent=0 // pred_fallthru
    _
  // Predicated region
  $region26: #{double_conv.1} parent=0 // pred_check
    _
  $region27: #{double_conv.1} parent=0 // pred_check_branch
    %28 = sbr.rel (0) target = $region29
  $region28: #{double_conv.1} parent=0 // pred_region
    _
  $region29: #{double_conv.1} parent=0 // pred_fallthru
    _
  // Predicated region
  $region30: #{double_conv.1} parent=0 // pred_check
    _
  $region31: #{double_conv.1} parent=0 // pred_check_branch
    %30 = sbr.rel (0) target = $region33
  $region32: #{double_conv.1} parent=0 // pred_region
    _
  $region33: #{double_conv.1} parent=0 // pred_fallthru
    _
  // Predicated region
  $region34: #{double_conv.1} parent=0 // pred_check
    _
  $region35: #{double_conv.1} parent=0 // pred_check_branch
    %32 = sbr.rel (0) target = $region37
  $region36: #{double_conv.1} parent=0 // pred_region
    _
  $region37: #{double_conv.1} parent=0 // pred_fallthru
    _
  // Predicated region
  $region38: #{double_conv.1} parent=0 // pred_check
    _
  $region39: #{double_conv.1} parent=0 // pred_check_branch
    %34 = sbr.rel (0) target = $region41
  $region40: #{double_conv.1} parent=0 // pred_region
    _
  $region41: #{double_conv.1} parent=0 // pred_fallthru
    _
  %v35 = vld [vmem:[%s0] sm:$0xff]
  %v36 = vld [vmem:[%s0 + $0x8] sm:$0xff]
  %v37 = vld [vmem:[%s0 + $0x10] sm:$0xff]
  %v38 = vld [vmem:[%s0 + $0x18] sm:$0xff]
  %v39 = vld [vmem:[%s1] sm:$0xff]
  %v40 = vld [vmem:[%s1 + $0x8] sm:$0xff]
  %v41 = vld [vmem:[%s1 + $0x10] sm:$0xff]
  %v42 = vld [vmem:[%s1 + $0x18] sm:$0xff]
  %s43 = scalar_lea.vmem %s1, 32
  %v44 = vld [vmem:[%s43] sm:$0xff]
  %v45 = vld [vmem:[%s43 + $0x8] sm:$0xff]
  %v46 = vld [vmem:[%s43 + $0x10] sm:$0xff]
  %v47 = vld [vmem:[%s43 + $0x18] sm:$0xff]
  %s48 = scalar_lea.vmem %s2, 64
  %v49 = vld [vmem:[%s48] sm:$0xff]
  %v50 = vld [vmem:[%s48 + $0x8] sm:$0xff]
  %v51 = vld [vmem:[%s48 + $0x10] sm:$0xff]
  %v52 = vld [vmem:[%s48 + $0x18] sm:$0xff]
  %v53 = vld [vmem:[%s48 + $0x20] sm:$0xff]
  %v54 = vld [vmem:[%s48 + $0x28] sm:$0xff]
  %v55 = vld [vmem:[%s48 + $0x30] sm:$0xff]
  %v56 = vld [vmem:[%s48 + $0x38] sm:$0xff]
  %vm57 = vcmask 261120
  %v59 = vsel %vm57, %v39, 0
  %v62 = vsel %vm57, %v40, 0
  %v65 = vsel %vm57, %v41, 0
  %v68 = vsel %vm57, %v42, 0
  %70 = vmatprep.subr.mxu0 0.0
  %71 = vmatpush1.msra.mxu0 0.0
  %72 = vmatprep.subr.mxu0 0.0
  %73 = vmatpush1.msra.mxu0 0.0
  %74 = vmatprep.subr.mxu0 0.0
  %75 = vmatpush1.msra.mxu0 0.0
  %76 = vmatprep.subr.mxu0 0.0
  %77 = vmatpush1.msra.mxu0 0.0
  %78 = vmatprep.subr.mxu0 0.0
  %79 = vmatpush1.msra.mxu0 0.0
  %80 = vmatprep.subr.mxu0 0.0
  %81 = vmatpush1.msra.mxu0 0.0
  %82 = vmatprep.subr.mxu0 0.0
  %83 = vmatpush1.msra.mxu0 0.0
  %84 = vmatprep.subr.mxu0 0.0
  %85 = vmatpush1.msra.mxu0 0.0
  %86 = vmatprep.subr.mxu0 0.0
  %87 = vmatpush1.msra.mxu0 0.0
  %88 = vmatprep.subr.mxu0 0.0
  %89 = vmatpush1.msra.mxu0 0.0
  %90 = vmatprep.subr.mxu0 0.0
  %91 = vmatpush1.msra.mxu0 0.0
  %92 = vmatprep.subr.mxu0 0.0
  %93 = vmatpush1.msra.mxu0 0.0
  %94 = vmatprep.subr.mxu0 0.0
  %95 = vmatpush1.msra.mxu0 %v38
  %96 = vmatprep.subr.mxu0 0.0
  %97 = vmatpush1.msra.mxu0 %v37
  %98 = vmatprep.subr.mxu0 0.0
  %99 = vmatpush1.msra.mxu0 %v36
  %100 = vmatprep.subr.mxu0 0.0
  %101 = vmatpush1.msra.mxu0 %v35
  %102 = vmatprep.subr.mxu0 0.0
  %103 = vmatpush2.msra.mxu0 0.0
  %104 = vmatprep.subr.mxu0 0.0
  %105 = vmatpush2.msra.mxu0 0.0
  %106 = vmatprep.subr.mxu0 0.0
  %107 = vmatpush2.msra.mxu0 0.0
  %108 = vmatprep.subr.mxu0 0.0
  %109 = vmatpush2.msra.mxu0 0.0
  %110 = vmatprep.subr.mxu0 0.0
  %111 = vmatpush2.msra.mxu0 0.0
  %112 = vmatprep.subr.mxu0 0.0
  %113 = vmatpush2.msra.mxu0 0.0
  %114 = vmatprep.subr.mxu0 0.0
  %115 = vmatpush2.msra.mxu0 0.0
  %116 = vmatprep.subr.mxu0 0.0
  %117 = vmatpush2.msra.mxu0 0.0
  %118 = vmatprep.subr.mxu0 0.0
  %119 = vmatpush2.msra.mxu0 0.0
  %120 = vmatprep.subr.mxu0 0.0
  %121 = vmatpush2.msra.mxu0 0.0
  %122 = vmatprep.subr.mxu0 0.0
  %123 = vmatpush2.msra.mxu0 0.0
  %124 = vmatprep.subr.mxu0 0.0
  %125 = vmatpush2.msra.mxu0 0.0
  %126 = vmatprep.subr.mxu0 0.0
  %127 = vmatpush2.msra.mxu0 0.0
  %128 = vmatprep.subr.mxu0 0.0
  %129 = vmatpush2.msra.mxu0 0.0
  %130 = vmatprep.subr.mxu0 0.0
  %131 = vmatpush2.msra.mxu0 0.0
  %132 = vmatprep.subr.mxu0 0.0
  %133 = vmatpush2.msra.mxu0 0.0
  %134 = vmatprep.mubr.f32.mxu0 0.0
  %135 = vmatmul.mubr.f32.gmra.mxu0 %v59
  %v136 = vpop.f32.mrf.mxu0
  %v137 = vadd.f32 0.0, %v136
  %v138 = vpop.f32.mrf.mxu0
  %139 = vmatprep.mubr.f32.mxu0 0.0
  %140 = vmatmul.mubr.f32.gmra.mxu0 %v62
  %v141 = vpop.f32.mrf.mxu0
  %v142 = vadd.f32 0.0, %v141
  %v143 = vpop.f32.mrf.mxu0
  %144 = vmatprep.mubr.f32.mxu0 0.0
  %145 = vmatmul.mubr.f32.gmra.mxu0 %v65
  %v146 = vpop.f32.mrf.mxu0
  %v147 = vadd.f32 0.0, %v146
  %v148 = vpop.f32.mrf.mxu0
  %149 = vmatprep.mubr.f32.mxu0 0.0
  %150 = vmatmul.mubr.f32.gmra.mxu0 %v68
  %v151 = vpop.f32.mrf.mxu0
  %v152 = vadd.f32 0.0, %v151
  %v153 = vpop.f32.mrf.mxu0
  %154 = vdwg.mxu0
  %v155 = vld [vmem:[%s2] sm:$0xff]
  %v156 = vld [vmem:[%s2 + $0x8] sm:$0xff]
  %v157 = vld [vmem:[%s2 + $0x10] sm:$0xff]
  %v158 = vld [vmem:[%s2 + $0x18] sm:$0xff]
  %v159 = vld [vmem:[%s2 + $0x20] sm:$0xff]
  %v160 = vld [vmem:[%s2 + $0x28] sm:$0xff]
  %v161 = vld [vmem:[%s2 + $0x30] sm:$0xff]
  %v162 = vld [vmem:[%s2 + $0x38] sm:$0xff]
  %vm163 = vcmask 523264
  %v165 = vsel %vm163, %v137, 0
  %v168 = vsel %vm163, %v142, 0
  %v171 = vsel %vm163, %v147, 0
  %v174 = vsel %vm163, %v152, 0
  %176 = vmatprep.subr.mxu0 0.0
  %177 = vmatpush1.msra.mxu0 0.0
  %178 = vmatprep.subr.mxu0 0.0
  %179 = vmatpush1.msra.mxu0 0.0
  %180 = vmatprep.subr.mxu0 0.0
  %181 = vmatpush1.msra.mxu0 0.0
  %182 = vmatprep.subr.mxu0 0.0
  %183 = vmatpush1.msra.mxu0 0.0
  %184 = vmatprep.subr.mxu0 0.0
  %185 = vmatpush1.msra.mxu0 0.0
  %186 = vmatprep.subr.mxu0 0.0
  %187 = vmatpush1.msra.mxu0 0.0
  %188 = vmatprep.subr.mxu0 0.0
  %189 = vmatpush1.msra.mxu0 0.0
  %190 = vmatprep.subr.mxu0 0.0
  %191 = vmatpush1.msra.mxu0 0.0
  %192 = vmatprep.subr.mxu0 0.0
  %193 = vmatpush1.msra.mxu0 %v162
  %194 = vmatprep.subr.mxu0 0.0
  %195 = vmatpush1.msra.mxu0 %v161
  %196 = vmatprep.subr.mxu0 0.0
  %197 = vmatpush1.msra.mxu0 %v160
  %198 = vmatprep.subr.mxu0 0.0
  %199 = vmatpush1.msra.mxu0 %v159
  %200 = vmatprep.subr.mxu0 0.0
  %201 = vmatpush1.msra.mxu0 %v158
  %202 = vmatprep.subr.mxu0 0.0
  %203 = vmatpush1.msra.mxu0 %v157
  %204 = vmatprep.subr.mxu0 0.0
  %205 = vmatpush1.msra.mxu0 %v156
  %206 = vmatprep.subr.mxu0 0.0
  %207 = vmatpush1.msra.mxu0 %v155
  %208 = vmatprep.subr.mxu0 0.0
  %209 = vmatpush2.msra.mxu0 0.0
  %210 = vmatprep.subr.mxu0 0.0
  %211 = vmatpush2.msra.mxu0 0.0
  %212 = vmatprep.subr.mxu0 0.0
  %213 = vmatpush2.msra.mxu0 0.0
  %214 = vmatprep.subr.mxu0 0.0
  %215 = vmatpush2.msra.mxu0 0.0
  %216 = vmatprep.subr.mxu0 0.0
  %217 = vmatpush2.msra.mxu0 0.0
  %218 = vmatprep.subr.mxu0 0.0
  %219 = vmatpush2.msra.mxu0 0.0
  %220 = vmatprep.subr.mxu0 0.0
  %221 = vmatpush2.msra.mxu0 0.0
  %222 = vmatprep.subr.mxu0 0.0
  %223 = vmatpush2.msra.mxu0 0.0
  %224 = vmatprep.subr.mxu0 0.0
  %225 = vmatpush2.msra.mxu0 0.0
  %226 = vmatprep.subr.mxu0 0.0
  %227 = vmatpush2.msra.mxu0 0.0
  %228 = vmatprep.subr.mxu0 0.0
  %229 = vmatpush2.msra.mxu0 0.0
  %230 = vmatprep.subr.mxu0 0.0
  %231 = vmatpush2.msra.mxu0 0.0
  %232 = vmatprep.subr.mxu0 0.0
  %233 = vmatpush2.msra.mxu0 0.0
  %234 = vmatprep.subr.mxu0 0.0
  %235 = vmatpush2.msra.mxu0 0.0
  %236 = vmatprep.subr.mxu0 0.0
  %237 = vmatpush2.msra.mxu0 0.0
  %238 = vmatprep.subr.mxu0 0.0
  %239 = vmatpush2.msra.mxu0 0.0
  %240 = vmatprep.mubr.f32.mxu0 0.0
  %241 = vmatmul.mubr.f32.gmra.mxu0 %v165
  %v242 = vpop.f32.mrf.mxu0
  %v243 = vadd.f32 0.0, %v242
  %v244 = vpop.f32.mrf.mxu0
  %245 = vmatprep.mubr.f32.mxu0 0.0
  %246 = vmatmul.mubr.f32.gmra.mxu0 %v168
  %v247 = vpop.f32.mrf.mxu0
  %v248 = vadd.f32 0.0, %v247
  %v249 = vpop.f32.mrf.mxu0
  %250 = vmatprep.mubr.f32.mxu0 0.0
  %251 = vmatmul.mubr.f32.gmra.mxu0 %v171
  %v252 = vpop.f32.mrf.mxu0
  %v253 = vadd.f32 0.0, %v252
  %v254 = vpop.f32.mrf.mxu0
  %255 = vmatprep.mubr.f32.mxu0 0.0
  %256 = vmatmul.mubr.f32.gmra.mxu0 %v174
  %v257 = vpop.f32.mrf.mxu0
  %v258 = vadd.f32 0.0, %v257
  %v259 = vpop.f32.mrf.mxu0
  %260 = vdwg.mxu0
  %v262 = vsel %vm163, %v35, 0
  %v265 = vsel %vm163, %v36, 0
  %v268 = vsel %vm163, %v37, 0
  %v271 = vsel %vm163, %v38, 0
  %273 = vmatprep.subr.mxu0 0.0
  %274 = vmatpush1.msra.mxu0 0.0
  %275 = vmatprep.subr.mxu0 0.0
  %276 = vmatpush1.msra.mxu0 0.0
  %277 = vmatprep.subr.mxu0 0.0
  %278 = vmatpush1.msra.mxu0 0.0
  %279 = vmatprep.subr.mxu0 0.0
  %280 = vmatpush1.msra.mxu0 0.0
  %281 = vmatprep.subr.mxu0 0.0
  %282 = vmatpush1.msra.mxu0 0.0
  %283 = vmatprep.subr.mxu0 0.0
  %284 = vmatpush1.msra.mxu0 0.0
  %285 = vmatprep.subr.mxu0 0.0
  %286 = vmatpush1.msra.mxu0 0.0
  %287 = vmatprep.subr.mxu0 0.0
  %288 = vmatpush1.msra.mxu0 0.0
  %289 = vmatprep.subr.mxu0 0.0
  %290 = vmatpush1.msra.mxu0 %v56
  %291 = vmatprep.subr.mxu0 0.0
  %292 = vmatpush1.msra.mxu0 %v55
  %293 = vmatprep.subr.mxu0 0.0
  %294 = vmatpush1.msra.mxu0 %v54
  %295 = vmatprep.subr.mxu0 0.0
  %296 = vmatpush1.msra.mxu0 %v53
  %297 = vmatprep.subr.mxu0 0.0
  %298 = vmatpush1.msra.mxu0 %v52
  %299 = vmatprep.subr.mxu0 0.0
  %300 = vmatpush1.msra.mxu0 %v51
  %301 = vmatprep.subr.mxu0 0.0
  %302 = vmatpush1.msra.mxu0 %v50
  %303 = vmatprep.subr.mxu0 0.0
  %304 = vmatpush1.msra.mxu0 %v49
  %305 = vmatprep.subr.mxu0 0.0
  %306 = vmatpush2.msra.mxu0 0.0
  %307 = vmatprep.subr.mxu0 0.0
  %308 = vmatpush2.msra.mxu0 0.0
  %309 = vmatprep.subr.mxu0 0.0
  %310 = vmatpush2.msra.mxu0 0.0
  %311 = vmatprep.subr.mxu0 0.0
  %312 = vmatpush2.msra.mxu0 0.0
  %313 = vmatprep.subr.mxu0 0.0
  %314 = vmatpush2.msra.mxu0 0.0
  %315 = vmatprep.subr.mxu0 0.0
  %316 = vmatpush2.msra.mxu0 0.0
  %317 = vmatprep.subr.mxu0 0.0
  %318 = vmatpush2.msra.mxu0 0.0
  %319 = vmatprep.subr.mxu0 0.0
  %320 = vmatpush2.msra.mxu0 0.0
  %321 = vmatprep.subr.mxu0 0.0
  %322 = vmatpush2.msra.mxu0 0.0
  %323 = vmatprep.subr.mxu0 0.0
  %324 = vmatpush2.msra.mxu0 0.0
  %325 = vmatprep.subr.mxu0 0.0
  %326 = vmatpush2.msra.mxu0 0.0
  %327 = vmatprep.subr.mxu0 0.0
  %328 = vmatpush2.msra.mxu0 0.0
  %329 = vmatprep.subr.mxu0 0.0
  %330 = vmatpush2.msra.mxu0 0.0
  %331 = vmatprep.subr.mxu0 0.0
  %332 = vmatpush2.msra.mxu0 0.0
  %333 = vmatprep.subr.mxu0 0.0
  %334 = vmatpush2.msra.mxu0 0.0
  %335 = vmatprep.subr.mxu0 0.0
  %336 = vmatpush2.msra.mxu0 0.0
  %337 = vmatprep.mubr.f32.mxu0 0.0
  %338 = vmatmul.mubr.f32.gmra.mxu0 %v262
  %v339 = vpop.f32.mrf.mxu0
  %v340 = vadd.f32 %v243, %v339
  %v341 = vpop.f32.mrf.mxu0
  %342 = vmatprep.mubr.f32.mxu0 0.0
  %343 = vmatmul.mubr.f32.gmra.mxu0 %v265
  %v344 = vpop.f32.mrf.mxu0
  %v345 = vadd.f32 %v248, %v344
  %v346 = vpop.f32.mrf.mxu0
  %347 = vmatprep.mubr.f32.mxu0 0.0
  %348 = vmatmul.mubr.f32.gmra.mxu0 %v268
  %v349 = vpop.f32.mrf.mxu0
  %v350 = vadd.f32 %v253, %v349
  %v351 = vpop.f32.mrf.mxu0
  %352 = vmatprep.mubr.f32.mxu0 0.0
  %353 = vmatmul.mubr.f32.gmra.mxu0 %v271
  %v354 = vpop.f32.mrf.mxu0
  %v355 = vadd.f32 %v258, %v354
  %v356 = vpop.f32.mrf.mxu0
  %357 = vdwg.mxu0
  %v359 = vsel %vm57, %v44, 0
  %v362 = vsel %vm57, %v45, 0
  %v365 = vsel %vm57, %v46, 0
  %v368 = vsel %vm57, %v47, 0
  %370 = vmatprep.subr.mxu0 0.0
  %371 = vmatpush1.msra.mxu0 0.0
  %372 = vmatprep.subr.mxu0 0.0
  %373 = vmatpush1.msra.mxu0 0.0
  %374 = vmatprep.subr.mxu0 0.0
  %375 = vmatpush1.msra.mxu0 0.0
  %376 = vmatprep.subr.mxu0 0.0
  %377 = vmatpush1.msra.mxu0 0.0
  %378 = vmatprep.subr.mxu0 0.0
  %379 = vmatpush1.msra.mxu0 0.0
  %380 = vmatprep.subr.mxu0 0.0
  %381 = vmatpush1.msra.mxu0 0.0
  %382 = vmatprep.subr.mxu0 0.0
  %383 = vmatpush1.msra.mxu0 0.0
  %384 = vmatprep.subr.mxu0 0.0
  %385 = vmatpush1.msra.mxu0 0.0
  %386 = vmatprep.subr.mxu0 0.0
  %387 = vmatpush1.msra.mxu0 0.0
  %388 = vmatprep.subr.mxu0 0.0
  %389 = vmatpush1.msra.mxu0 0.0
  %390 = vmatprep.subr.mxu0 0.0
  %391 = vmatpush1.msra.mxu0 0.0
  %392 = vmatprep.subr.mxu0 0.0
  %393 = vmatpush1.msra.mxu0 0.0
  %394 = vmatprep.subr.mxu0 0.0
  %395 = vmatpush1.msra.mxu0 %v38
  %396 = vmatprep.subr.mxu0 0.0
  %397 = vmatpush1.msra.mxu0 %v37
  %398 = vmatprep.subr.mxu0 0.0
  %399 = vmatpush1.msra.mxu0 %v36
  %400 = vmatprep.subr.mxu0 0.0
  %401 = vmatpush1.msra.mxu0 %v35
  %402 = vmatprep.subr.mxu0 0.0
  %403 = vmatpush2.msra.mxu0 0.0
  %404 = vmatprep.subr.mxu0 0.0
  %405 = vmatpush2.msra.mxu0 0.0
  %406 = vmatprep.subr.mxu0 0.0
  %407 = vmatpush2.msra.mxu0 0.0
  %408 = vmatprep.subr.mxu0 0.0
  %409 = vmatpush2.msra.mxu0 0.0
  %410 = vmatprep.subr.mxu0 0.0
  %411 = vmatpush2.msra.mxu0 0.0
  %412 = vmatprep.subr.mxu0 0.0
  %413 = vmatpush2.msra.mxu0 0.0
  %414 = vmatprep.subr.mxu0 0.0
  %415 = vmatpush2.msra.mxu0 0.0
  %416 = vmatprep.subr.mxu0 0.0
  %417 = vmatpush2.msra.mxu0 0.0
  %418 = vmatprep.subr.mxu0 0.0
  %419 = vmatpush2.msra.mxu0 0.0
  %420 = vmatprep.subr.mxu0 0.0
  %421 = vmatpush2.msra.mxu0 0.0
  %422 = vmatprep.subr.mxu0 0.0
  %423 = vmatpush2.msra.mxu0 0.0
  %424 = vmatprep.subr.mxu0 0.0
  %425 = vmatpush2.msra.mxu0 0.0
  %426 = vmatprep.subr.mxu0 0.0
  %427 = vmatpush2.msra.mxu0 0.0
  %428 = vmatprep.subr.mxu0 0.0
  %429 = vmatpush2.msra.mxu0 0.0
  %430 = vmatprep.subr.mxu0 0.0
  %431 = vmatpush2.msra.mxu0 0.0
  %432 = vmatprep.subr.mxu0 0.0
  %433 = vmatpush2.msra.mxu0 0.0
  %434 = vmatprep.mubr.f32.mxu0 0.0
  %435 = vmatmul.mubr.f32.gmra.mxu0 %v359
  %v436 = vpop.f32.mrf.mxu0
  %v437 = vadd.f32 0.0, %v436
  %v438 = vpop.f32.mrf.mxu0
  %439 = vmatprep.mubr.f32.mxu0 0.0
  %440 = vmatmul.mubr.f32.gmra.mxu0 %v362
  %v441 = vpop.f32.mrf.mxu0
  %v442 = vadd.f32 0.0, %v441
  %v443 = vpop.f32.mrf.mxu0
  %444 = vmatprep.mubr.f32.mxu0 0.0
  %445 = vmatmul.mubr.f32.gmra.mxu0 %v365
  %v446 = vpop.f32.mrf.mxu0
  %v447 = vadd.f32 0.0, %v446
  %v448 = vpop.f32.mrf.mxu0
  %449 = vmatprep.mubr.f32.mxu0 0.0
  %450 = vmatmul.mubr.f32.gmra.mxu0 %v368
  %v451 = vpop.f32.mrf.mxu0
  %v452 = vadd.f32 0.0, %v451
  %v453 = vpop.f32.mrf.mxu0
  %454 = vdwg.mxu0
  %s455 = scalar_lea.vmem %s2, 128
  %v456 = vld [vmem:[%s455] sm:$0xff]
  %v457 = vld [vmem:[%s455 + $0x8] sm:$0xff]
  %v458 = vld [vmem:[%s455 + $0x10] sm:$0xff]
  %v459 = vld [vmem:[%s455 + $0x18] sm:$0xff]
  %v460 = vld [vmem:[%s455 + $0x20] sm:$0xff]
  %v461 = vld [vmem:[%s455 + $0x28] sm:$0xff]
  %v462 = vld [vmem:[%s455 + $0x30] sm:$0xff]
  %v463 = vld [vmem:[%s455 + $0x38] sm:$0xff]
  %v465 = vsel %vm163, %v437, 0
  %v468 = vsel %vm163, %v442, 0
  %v471 = vsel %vm163, %v447, 0
  %v474 = vsel %vm163, %v452, 0
  %476 = vmatprep.subr.mxu0 0.0
  %477 = vmatpush1.msra.mxu0 0.0
  %478 = vmatprep.subr.mxu0 0.0
  %479 = vmatpush1.msra.mxu0 0.0
  %480 = vmatprep.subr.mxu0 0.0
  %481 = vmatpush1.msra.mxu0 0.0
  %482 = vmatprep.subr.mxu0 0.0
  %483 = vmatpush1.msra.mxu0 0.0
  %484 = vmatprep.subr.mxu0 0.0
  %485 = vmatpush1.msra.mxu0 0.0
  %486 = vmatprep.subr.mxu0 0.0
  %487 = vmatpush1.msra.mxu0 0.0
  %488 = vmatprep.subr.mxu0 0.0
  %489 = vmatpush1.msra.mxu0 0.0
  %490 = vmatprep.subr.mxu0 0.0
  %491 = vmatpush1.msra.mxu0 0.0
  %492 = vmatprep.subr.mxu0 0.0
  %493 = vmatpush1.msra.mxu0 %v463
  %494 = vmatprep.subr.mxu0 0.0
  %495 = vmatpush1.msra.mxu0 %v462
  %496 = vmatprep.subr.mxu0 0.0
  %497 = vmatpush1.msra.mxu0 %v461
  %498 = vmatprep.subr.mxu0 0.0
  %499 = vmatpush1.msra.mxu0 %v460
  %500 = vmatprep.subr.mxu0 0.0
  %501 = vmatpush1.msra.mxu0 %v459
  %502 = vmatprep.subr.mxu0 0.0
  %503 = vmatpush1.msra.mxu0 %v458
  %504 = vmatprep.subr.mxu0 0.0
  %505 = vmatpush1.msra.mxu0 %v457
  %506 = vmatprep.subr.mxu0 0.0
  %507 = vmatpush1.msra.mxu0 %v456
  %508 = vmatprep.subr.mxu0 0.0
  %509 = vmatpush2.msra.mxu0 0.0
  %510 = vmatprep.subr.mxu0 0.0
  %511 = vmatpush2.msra.mxu0 0.0
  %512 = vmatprep.subr.mxu0 0.0
  %513 = vmatpush2.msra.mxu0 0.0
  %514 = vmatprep.subr.mxu0 0.0
  %515 = vmatpush2.msra.mxu0 0.0
  %516 = vmatprep.subr.mxu0 0.0
  %517 = vmatpush2.msra.mxu0 0.0
  %518 = vmatprep.subr.mxu0 0.0
  %519 = vmatpush2.msra.mxu0 0.0
  %520 = vmatprep.subr.mxu0 0.0
  %521 = vmatpush2.msra.mxu0 0.0
  %522 = vmatprep.subr.mxu0 0.0
  %523 = vmatpush2.msra.mxu0 0.0
  %524 = vmatprep.subr.mxu0 0.0
  %525 = vmatpush2.msra.mxu0 0.0
  %526 = vmatprep.subr.mxu0 0.0
  %527 = vmatpush2.msra.mxu0 0.0
  %528 = vmatprep.subr.mxu0 0.0
  %529 = vmatpush2.msra.mxu0 0.0
  %530 = vmatprep.subr.mxu0 0.0
  %531 = vmatpush2.msra.mxu0 0.0
  %532 = vmatprep.subr.mxu0 0.0
  %533 = vmatpush2.msra.mxu0 0.0
  %534 = vmatprep.subr.mxu0 0.0
  %535 = vmatpush2.msra.mxu0 0.0
  %536 = vmatprep.subr.mxu0 0.0
  %537 = vmatpush2.msra.mxu0 0.0
  %538 = vmatprep.subr.mxu0 0.0
  %539 = vmatpush2.msra.mxu0 0.0
  %540 = vmatprep.mubr.f32.mxu0 0.0
  %541 = vmatmul.mubr.f32.gmra.mxu0 %v465
  %v542 = vpop.f32.mrf.mxu0
  %v543 = vadd.f32 0.0, %v542
  %v544 = vpop.f32.mrf.mxu0
  %545 = vmatprep.mubr.f32.mxu0 0.0
  %546 = vmatmul.mubr.f32.gmra.mxu0 %v468
  %v547 = vpop.f32.mrf.mxu0
  %v548 = vadd.f32 0.0, %v547
  %v549 = vpop.f32.mrf.mxu0
  %550 = vmatprep.mubr.f32.mxu0 0.0
  %551 = vmatmul.mubr.f32.gmra.mxu0 %v471
  %v552 = vpop.f32.mrf.mxu0
  %v553 = vadd.f32 0.0, %v552
  %v554 = vpop.f32.mrf.mxu0
  %555 = vmatprep.mubr.f32.mxu0 0.0
  %556 = vmatmul.mubr.f32.gmra.mxu0 %v474
  %v557 = vpop.f32.mrf.mxu0
  %v558 = vadd.f32 0.0, %v557
  %v559 = vpop.f32.mrf.mxu0
  %560 = vdwg.mxu0
  %v561 = vadd.f32 %v340, %v543
  %v562 = vadd.f32 %v345, %v548
  %v563 = vadd.f32 %v350, %v553
  %v564 = vadd.f32 %v355, %v558
  %v565 = vld [vmem:[%s3] sm:$0x1]
  %v566 = vld [vmem:[%s4] sm:$0x1]
  %v567 = vld [vmem:[%s5] sm:$0xff]
  %v568 = vld [vmem:[%s5 + $0x8] sm:$0xff]
  %v569 = vld [vmem:[%s5 + $0x10] sm:$0xff]
  %v570 = vld [vmem:[%s5 + $0x18] sm:$0xff]
  %v571 = vld [vmem:[%s5 + $0x20] sm:$0xff]
  %v572 = vld [vmem:[%s5 + $0x28] sm:$0xff]
  %v573 = vld [vmem:[%s5 + $0x30] sm:$0xff]
  %v574 = vld [vmem:[%s5 + $0x38] sm:$0xff]
  %v575 = vld [vmem:[%s5 + $0x40] sm:$0xff]
  %v576 = vld [vmem:[%s5 + $0x48] sm:$0xff]
  %v577 = vld [vmem:[%s5 + $0x50] sm:$0xff]
  %v578 = vld [vmem:[%s5 + $0x58] sm:$0xff]
  %v579 = vld [vmem:[%s5 + $0x60] sm:$0xff]
  %v580 = vld [vmem:[%s5 + $0x68] sm:$0xff]
  %v581 = vld [vmem:[%s5 + $0x70] sm:$0xff]
  %v582 = vld [vmem:[%s5 + $0x78] sm:$0xff]
  %v583 = vadd.f32 %v561, %v562
  %v584 = vadd.f32 %v583, %v563
  %v585 = vadd.f32 %v584, %v564
  %v586 = vrot.slane %v585, 4
  %v587 = vadd.f32 %v585, %v586
  %v588 = vrot.slane %v587, 2
  %v589 = vadd.f32 %v587, %v588
  %v590 = vrot.slane %v589, 1
  %v591 = vadd.f32 %v589, %v590
  %592 = vmatprep.subr.mxu0 0.0
  %593 = vmatpush1.msra.mxu0 %v582
  %594 = vmatprep.subr.mxu0 0.0
  %595 = vmatpush1.msra.mxu0 %v581
  %596 = vmatprep.subr.mxu0 0.0
  %597 = vmatpush1.msra.mxu0 %v580
  %598 = vmatprep.subr.mxu0 0.0
  %599 = vmatpush1.msra.mxu0 %v579
  %600 = vmatprep.subr.mxu0 0.0
  %601 = vmatpush1.msra.mxu0 %v578
  %602 = vmatprep.subr.mxu0 0.0
  %603 = vmatpush1.msra.mxu0 %v577
  %604 = vmatprep.subr.mxu0 0.0
  %605 = vmatpush1.msra.mxu0 %v576
  %606 = vmatprep.subr.mxu0 0.0
  %607 = vmatpush1.msra.mxu0 %v575
  %608 = vmatprep.subr.mxu0 0.0
  %609 = vmatpush1.msra.mxu0 %v574
  %610 = vmatprep.subr.mxu0 0.0
  %611 = vmatpush1.msra.mxu0 %v573
  %612 = vmatprep.subr.mxu0 0.0
  %613 = vmatpush1.msra.mxu0 %v572
  %614 = vmatprep.subr.mxu0 0.0
  %615 = vmatpush1.msra.mxu0 %v571
  %616 = vmatprep.subr.mxu0 0.0
  %617 = vmatpush1.msra.mxu0 %v570
  %618 = vmatprep.subr.mxu0 0.0
  %619 = vmatpush1.msra.mxu0 %v569
  %620 = vmatprep.subr.mxu0 0.0
  %621 = vmatpush1.msra.mxu0 %v568
  %622 = vmatprep.subr.mxu0 0.0
  %623 = vmatpush1.msra.mxu0 %v567
  %624 = vmatprep.subr.mxu0 0.0
  %625 = vmatpush2.msra.mxu0 0.0
  %626 = vmatprep.subr.mxu0 0.0
  %627 = vmatpush2.msra.mxu0 0.0
  %628 = vmatprep.subr.mxu0 0.0
  %629 = vmatpush2.msra.mxu0 0.0
  %630 = vmatprep.subr.mxu0 0.0
  %631 = vmatpush2.msra.mxu0 0.0
  %632 = vmatprep.subr.mxu0 0.0
  %633 = vmatpush2.msra.mxu0 0.0
  %634 = vmatprep.subr.mxu0 0.0
  %635 = vmatpush2.msra.mxu0 0.0
  %636 = vmatprep.subr.mxu0 0.0
  %637 = vmatpush2.msra.mxu0 0.0
  %638 = vmatprep.subr.mxu0 0.0
  %639 = vmatpush2.msra.mxu0 0.0
  %640 = vmatprep.subr.mxu0 0.0
  %641 = vmatpush2.msra.mxu0 0.0
  %642 = vmatprep.subr.mxu0 0.0
  %643 = vmatpush2.msra.mxu0 0.0
  %644 = vmatprep.subr.mxu0 0.0
  %645 = vmatpush2.msra.mxu0 0.0
  %646 = vmatprep.subr.mxu0 0.0
  %647 = vmatpush2.msra.mxu0 0.0
  %648 = vmatprep.subr.mxu0 0.0
  %649 = vmatpush2.msra.mxu0 0.0
  %650 = vmatprep.subr.mxu0 0.0
  %651 = vmatpush2.msra.mxu0 0.0
  %652 = vmatprep.subr.mxu0 0.0
  %653 = vmatpush2.msra.mxu0 0.0
  %654 = vmatprep.subr.mxu0 0.0
  %655 = vmatpush2.msra.mxu0 0.0
  %656 = vmatprep.mubr.f32.mxu0 0.0
  %657 = vmatmul.mubr.f32.gmra.mxu0 %v591
  %v658 = vpop.f32.mrf.mxu0
  %v659 = vadd.f32 0.0, %v658
  %v660 = vpop.f32.mrf.mxu0
  %661 = vdwg.mxu0
  %v662 = vlaneseq
  %v663 = vshrl.u32 %v662, 7
  %v664 = vsub.s32 0, %v663
  %v665 = vrot.slane %v659, %v664
  %v666 = vsub.f32 %v561, %v665
  %v667 = vsub.f32 %v562, %v665
  %v668 = vsub.f32 %v563, %v665
  %v669 = vsub.f32 %v564, %v665
  %v670 = vmul.f32 %v666, %v666
  %v671 = vmul.f32 %v667, %v667
  %v672 = vmul.f32 %v668, %v668
  %v673 = vmul.f32 %v669, %v669
  %v674 = vadd.f32 %v670, %v671
  %v675 = vadd.f32 %v674, %v672
  %v676 = vadd.f32 %v675, %v673
  %v677 = vrot.slane %v676, 4
  %v678 = vadd.f32 %v676, %v677
  %v679 = vrot.slane %v678, 2
  %v680 = vadd.f32 %v678, %v679
  %v681 = vrot.slane %v680, 1
  %v682 = vadd.f32 %v680, %v681
  %683 = vmatprep.subr.mxu0 0.0
  %684 = vmatpush1.msra.mxu0 %v582
  %685 = vmatprep.subr.mxu0 0.0
  %686 = vmatpush1.msra.mxu0 %v581
  %687 = vmatprep.subr.mxu0 0.0
  %688 = vmatpush1.msra.mxu0 %v580
  %689 = vmatprep.subr.mxu0 0.0
  %690 = vmatpush1.msra.mxu0 %v579
  %691 = vmatprep.subr.mxu0 0.0
  %692 = vmatpush1.msra.mxu0 %v578
  %693 = vmatprep.subr.mxu0 0.0
  %694 = vmatpush1.msra.mxu0 %v577
  %695 = vmatprep.subr.mxu0 0.0
  %696 = vmatpush1.msra.mxu0 %v576
  %697 = vmatprep.subr.mxu0 0.0
  %698 = vmatpush1.msra.mxu0 %v575
  %699 = vmatprep.subr.mxu0 0.0
  %700 = vmatpush1.msra.mxu0 %v574
  %701 = vmatprep.subr.mxu0 0.0
  %702 = vmatpush1.msra.mxu0 %v573
  %703 = vmatprep.subr.mxu0 0.0
  %704 = vmatpush1.msra.mxu0 %v572
  %705 = vmatprep.subr.mxu0 0.0
  %706 = vmatpush1.msra.mxu0 %v571
  %707 = vmatprep.subr.mxu0 0.0
  %708 = vmatpush1.msra.mxu0 %v570
  %709 = vmatprep.subr.mxu0 0.0
  %710 = vmatpush1.msra.mxu0 %v569
  %711 = vmatprep.subr.mxu0 0.0
  %712 = vmatpush1.msra.mxu0 %v568
  %713 = vmatprep.subr.mxu0 0.0
  %714 = vmatpush1.msra.mxu0 %v567
  %715 = vmatprep.subr.mxu0 0.0
  %716 = vmatpush2.msra.mxu0 0.0
  %717 = vmatprep.subr.mxu0 0.0
  %718 = vmatpush2.msra.mxu0 0.0
  %719 = vmatprep.subr.mxu0 0.0
  %720 = vmatpush2.msra.mxu0 0.0
  %721 = vmatprep.subr.mxu0 0.0
  %722 = vmatpush2.msra.mxu0 0.0
  %723 = vmatprep.subr.mxu0 0.0
  %724 = vmatpush2.msra.mxu0 0.0
  %725 = vmatprep.subr.mxu0 0.0
  %726 = vmatpush2.msra.mxu0 0.0
  %727 = vmatprep.subr.mxu0 0.0
  %728 = vmatpush2.msra.mxu0 0.0
  %729 = vmatprep.subr.mxu0 0.0
  %730 = vmatpush2.msra.mxu0 0.0
  %731 = vmatprep.subr.mxu0 0.0
  %732 = vmatpush2.msra.mxu0 0.0
  %733 = vmatprep.subr.mxu0 0.0
  %734 = vmatpush2.msra.mxu0 0.0
  %735 = vmatprep.subr.mxu0 0.0
  %736 = vmatpush2.msra.mxu0 0.0
  %737 = vmatprep.subr.mxu0 0.0
  %738 = vmatpush2.msra.mxu0 0.0
  %739 = vmatprep.subr.mxu0 0.0
  %740 = vmatpush2.msra.mxu0 0.0
  %741 = vmatprep.subr.mxu0 0.0
  %742 = vmatpush2.msra.mxu0 0.0
  %743 = vmatprep.subr.mxu0 0.0
  %744 = vmatpush2.msra.mxu0 0.0
  %745 = vmatprep.subr.mxu0 0.0
  %746 = vmatpush2.msra.mxu0 0.0
  %747 = vmatprep.mubr.f32.mxu0 0.0
  %748 = vmatmul.mubr.f32.gmra.mxu0 %v682
  %v749 = vpop.f32.mrf.mxu0
  %v750 = vadd.f32 1e-05, %v749
  %v751 = vpop.f32.mrf.mxu0
  %752 = vdwg.mxu0
  %v753 = vrsqrt.pop %v750
  %v754 = vmul.f32 %v565, %v753
  %v756 = vlaneseq
  %v757 = vshrl.u32 %v756, 7
  %v758 = vsub.s32 0, %v757
  %v759 = vrot.slane %v754, %v758
  %v761 = vmul.f32 %v666, %v759
  %v762 = vmul.f32 %v667, %v759
  %v763 = vmul.f32 %v668, %v759
  %v764 = vmul.f32 %v669, %v759
  %v766 = vlaneseq
  %v767 = vshrl.u32 %v766, 7
  %v768 = vsub.s32 0, %v767
  %v769 = vrot.slane %v566, %v768
  %v771 = vadd.f32 %v761, %v769
  %v772 = vadd.f32 %v762, %v769
  %v773 = vadd.f32 %v763, %v769
  %v774 = vadd.f32 %v764, %v769
  %v775 = vmax.f32 %v771, 0.0
  %v776 = vmax.f32 %v772, 0.0
  %v777 = vmax.f32 %v773, 0.0
  %v778 = vmax.f32 %v774, 0.0
  %s779 = scalar_lea.vmem %s6, 128
  %v780 = vld [vmem:[%s779] sm:$0xff]
  %v781 = vld [vmem:[%s779 + $0x8] sm:$0xff]
  %v782 = vld [vmem:[%s779 + $0x10] sm:$0xff]
  %v783 = vld [vmem:[%s779 + $0x18] sm:$0xff]
  %v784 = vld [vmem:[%s779 + $0x20] sm:$0xff]
  %v785 = vld [vmem:[%s779 + $0x28] sm:$0xff]
  %v786 = vld [vmem:[%s779 + $0x30] sm:$0xff]
  %v787 = vld [vmem:[%s779 + $0x38] sm:$0xff]
  %v788 = vld [vmem:[%s779 + $0x40] sm:$0xff]
  %v789 = vld [vmem:[%s779 + $0x48] sm:$0xff]
  %v790 = vld [vmem:[%s779 + $0x50] sm:$0xff]
  %v791 = vld [vmem:[%s779 + $0x58] sm:$0xff]
  %v792 = vld [vmem:[%s779 + $0x60] sm:$0xff]
  %v793 = vld [vmem:[%s779 + $0x68] sm:$0xff]
  %v794 = vld [vmem:[%s779 + $0x70] sm:$0xff]
  %v795 = vld [vmem:[%s779 + $0x78] sm:$0xff]
  %796 = vmatprep.subr.mxu0 0.0
  %797 = vmatpush1.msra.mxu0 0.0
  %798 = vmatprep.subr.mxu0 0.0
  %799 = vmatpush1.msra.mxu0 0.0
  %800 = vmatprep.subr.mxu0 0.0
  %801 = vmatpush1.msra.mxu0 0.0
  %802 = vmatprep.subr.mxu0 0.0
  %803 = vmatpush1.msra.mxu0 0.0
  %804 = vmatprep.subr.mxu0 0.0
  %805 = vmatpush1.msra.mxu0 0.0
  %806 = vmatprep.subr.mxu0 0.0
  %807 = vmatpush1.msra.mxu0 0.0
  %808 = vmatprep.subr.mxu0 0.0
  %809 = vmatpush1.msra.mxu0 0.0
  %810 = vmatprep.subr.mxu0 0.0
  %811 = vmatpush1.msra.mxu0 0.0
  %812 = vmatprep.subr.mxu0 0.0
  %813 = vmatpush1.msra.mxu0 0.0
  %814 = vmatprep.subr.mxu0 0.0
  %815 = vmatpush1.msra.mxu0 0.0
  %816 = vmatprep.subr.mxu0 0.0
  %817 = vmatpush1.msra.mxu0 0.0
  %818 = vmatprep.subr.mxu0 0.0
  %819 = vmatpush1.msra.mxu0 0.0
  %820 = vmatprep.subr.mxu0 0.0
  %821 = vmatpush1.msra.mxu0 %v778
  %822 = vmatprep.subr.mxu0 0.0
  %823 = vmatpush1.msra.mxu0 %v777
  %824 = vmatprep.subr.mxu0 0.0
  %825 = vmatpush1.msra.mxu0 %v776
  %826 = vmatprep.subr.mxu0 0.0
  %827 = vmatpush1.msra.mxu0 %v775
  %828 = vmatprep.subr.mxu0 0.0
  %829 = vmatpush2.msra.mxu0 0.0
  %830 = vmatprep.subr.mxu0 0.0
  %831 = vmatpush2.msra.mxu0 0.0
  %832 = vmatprep.subr.mxu0 0.0
  %833 = vmatpush2.msra.mxu0 0.0
  %834 = vmatprep.subr.mxu0 0.0
  %835 = vmatpush2.msra.mxu0 0.0
  %836 = vmatprep.subr.mxu0 0.0
  %837 = vmatpush2.msra.mxu0 0.0
  %838 = vmatprep.subr.mxu0 0.0
  %839 = vmatpush2.msra.mxu0 0.0
  %840 = vmatprep.subr.mxu0 0.0
  %841 = vmatpush2.msra.mxu0 0.0
  %842 = vmatprep.subr.mxu0 0.0
  %843 = vmatpush2.msra.mxu0 0.0
  %844 = vmatprep.subr.mxu0 0.0
  %845 = vmatpush2.msra.mxu0 0.0
  %846 = vmatprep.subr.mxu0 0.0
  %847 = vmatpush2.msra.mxu0 0.0
  %848 = vmatprep.subr.mxu0 0.0
  %849 = vmatpush2.msra.mxu0 0.0
  %850 = vmatprep.subr.mxu0 0.0
  %851 = vmatpush2.msra.mxu0 0.0
  %852 = vmatprep.subr.mxu0 0.0
  %853 = vmatpush2.msra.mxu0 0.0
  %854 = vmatprep.subr.mxu0 0.0
  %855 = vmatpush2.msra.mxu0 0.0
  %856 = vmatprep.subr.mxu0 0.0
  %857 = vmatpush2.msra.mxu0 0.0
  %858 = vmatprep.subr.mxu0 0.0
  %859 = vmatpush2.msra.mxu0 0.0
  %860 = vmatprep.mubr.f32.mxu0 0.0
  %861 = vmatmul.mubr.f32.gmra.mxu0 %v59
  %v862 = vpop.f32.mrf.mxu0
  %v863 = vadd.f32 0.0, %v862
  %v864 = vpop.f32.mrf.mxu0
  %865 = vmatprep.mubr.f32.mxu0 0.0
  %866 = vmatmul.mubr.f32.gmra.mxu0 %v62
  %v867 = vpop.f32.mrf.mxu0
  %v868 = vadd.f32 0.0, %v867
  %v869 = vpop.f32.mrf.mxu0
  %870 = vmatprep.mubr.f32.mxu0 0.0
  %871 = vmatmul.mubr.f32.gmra.mxu0 %v65
  %v872 = vpop.f32.mrf.mxu0
  %v873 = vadd.f32 0.0, %v872
  %v874 = vpop.f32.mrf.mxu0
  %875 = vmatprep.mubr.f32.mxu0 0.0
  %876 = vmatmul.mubr.f32.gmra.mxu0 %v68
  %v877 = vpop.f32.mrf.mxu0
  %v878 = vadd.f32 0.0, %v877
  %v879 = vpop.f32.mrf.mxu0
  %880 = vdwg.mxu0
  %v881 = vld [vmem:[%s6] sm:$0xff]
  %v882 = vld [vmem:[%s6 + $0x8] sm:$0xff]
  %v883 = vld [vmem:[%s6 + $0x10] sm:$0xff]
  %v884 = vld [vmem:[%s6 + $0x18] sm:$0xff]
  %v885 = vld [vmem:[%s6 + $0x20] sm:$0xff]
  %v886 = vld [vmem:[%s6 + $0x28] sm:$0xff]
  %v887 = vld [vmem:[%s6 + $0x30] sm:$0xff]
  %v888 = vld [vmem:[%s6 + $0x38] sm:$0xff]
  %v889 = vld [vmem:[%s6 + $0x40] sm:$0xff]
  %v890 = vld [vmem:[%s6 + $0x48] sm:$0xff]
  %v891 = vld [vmem:[%s6 + $0x50] sm:$0xff]
  %v892 = vld [vmem:[%s6 + $0x58] sm:$0xff]
  %v893 = vld [vmem:[%s6 + $0x60] sm:$0xff]
  %v894 = vld [vmem:[%s6 + $0x68] sm:$0xff]
  %v895 = vld [vmem:[%s6 + $0x70] sm:$0xff]
  %v896 = vld [vmem:[%s6 + $0x78] sm:$0xff]
  %897 = vmatprep.subr.mxu0 0.0
  %898 = vmatpush1.msra.mxu0 %v896
  %899 = vmatprep.subr.mxu0 0.0
  %900 = vmatpush1.msra.mxu0 %v895
  %901 = vmatprep.subr.mxu0 0.0
  %902 = vmatpush1.msra.mxu0 %v894
  %903 = vmatprep.subr.mxu0 0.0
  %904 = vmatpush1.msra.mxu0 %v893
  %905 = vmatprep.subr.mxu0 0.0
  %906 = vmatpush1.msra.mxu0 %v892
  %907 = vmatprep.subr.mxu0 0.0
  %908 = vmatpush1.msra.mxu0 %v891
  %909 = vmatprep.subr.mxu0 0.0
  %910 = vmatpush1.msra.mxu0 %v890
  %911 = vmatprep.subr.mxu0 0.0
  %912 = vmatpush1.msra.mxu0 %v889
  %913 = vmatprep.subr.mxu0 0.0
  %914 = vmatpush1.msra.mxu0 %v888
  %915 = vmatprep.subr.mxu0 0.0
  %916 = vmatpush1.msra.mxu0 %v887
  %917 = vmatprep.subr.mxu0 0.0
  %918 = vmatpush1.msra.mxu0 %v886
  %919 = vmatprep.subr.mxu0 0.0
  %920 = vmatpush1.msra.mxu0 %v885
  %921 = vmatprep.subr.mxu0 0.0
  %922 = vmatpush1.msra.mxu0 %v884
  %923 = vmatprep.subr.mxu0 0.0
  %924 = vmatpush1.msra.mxu0 %v883
  %925 = vmatprep.subr.mxu0 0.0
  %926 = vmatpush1.msra.mxu0 %v882
  %927 = vmatprep.subr.mxu0 0.0
  %928 = vmatpush1.msra.mxu0 %v881
  %929 = vmatprep.subr.mxu0 0.0
  %930 = vmatpush2.msra.mxu0 0.0
  %931 = vmatprep.subr.mxu0 0.0
  %932 = vmatpush2.msra.mxu0 0.0
  %933 = vmatprep.subr.mxu0 0.0
  %934 = vmatpush2.msra.mxu0 0.0
  %935 = vmatprep.subr.mxu0 0.0
  %936 = vmatpush2.msra.mxu0 0.0
  %937 = vmatprep.subr.mxu0 0.0
  %938 = vmatpush2.msra.mxu0 0.0
  %939 = vmatprep.subr.mxu0 0.0
  %940 = vmatpush2.msra.mxu0 0.0
  %941 = vmatprep.subr.mxu0 0.0
  %942 = vmatpush2.msra.mxu0 0.0
  %943 = vmatprep.subr.mxu0 0.0
  %944 = vmatpush2.msra.mxu0 0.0
  %945 = vmatprep.subr.mxu0 0.0
  %946 = vmatpush2.msra.mxu0 0.0
  %947 = vmatprep.subr.mxu0 0.0
  %948 = vmatpush2.msra.mxu0 0.0
  %949 = vmatprep.subr.mxu0 0.0
  %950 = vmatpush2.msra.mxu0 0.0
  %951 = vmatprep.subr.mxu0 0.0
  %952 = vmatpush2.msra.mxu0 0.0
  %953 = vmatprep.subr.mxu0 0.0
  %954 = vmatpush2.msra.mxu0 0.0
  %955 = vmatprep.subr.mxu0 0.0
  %956 = vmatpush2.msra.mxu0 0.0
  %957 = vmatprep.subr.mxu0 0.0
  %958 = vmatpush2.msra.mxu0 0.0
  %959 = vmatprep.subr.mxu0 0.0
  %960 = vmatpush2.msra.mxu0 0.0
  %961 = vmatprep.mubr.f32.mxu0 0.0
  %962 = vmatmul.mubr.f32.gmra.mxu0 %v863
  %v963 = vpop.f32.mrf.mxu0
  %v964 = vadd.f32 0.0, %v963
  %v965 = vpop.f32.mrf.mxu0
  %966 = vmatprep.mubr.f32.mxu0 0.0
  %967 = vmatmul.mubr.f32.gmra.mxu0 %v868
  %v968 = vpop.f32.mrf.mxu0
  %v969 = vadd.f32 0.0, %v968
  %v970 = vpop.f32.mrf.mxu0
  %971 = vmatprep.mubr.f32.mxu0 0.0
  %972 = vmatmul.mubr.f32.gmra.mxu0 %v873
  %v973 = vpop.f32.mrf.mxu0
  %v974 = vadd.f32 0.0, %v973
  %v975 = vpop.f32.mrf.mxu0
  %976 = vmatprep.mubr.f32.mxu0 0.0
  %977 = vmatmul.mubr.f32.gmra.mxu0 %v878
  %v978 = vpop.f32.mrf.mxu0
  %v979 = vadd.f32 0.0, %v978
  %v980 = vpop.f32.mrf.mxu0
  %981 = vdwg.mxu0
  %982 = vmatprep.subr.mxu0 0.0
  %983 = vmatpush1.msra.mxu0 %v795
  %984 = vmatprep.subr.mxu0 0.0
  %985 = vmatpush1.msra.mxu0 %v794
  %986 = vmatprep.subr.mxu0 0.0
  %987 = vmatpush1.msra.mxu0 %v793
  %988 = vmatprep.subr.mxu0 0.0
  %989 = vmatpush1.msra.mxu0 %v792
  %990 = vmatprep.subr.mxu0 0.0
  %991 = vmatpush1.msra.mxu0 %v791
  %992 = vmatprep.subr.mxu0 0.0
  %993 = vmatpush1.msra.mxu0 %v790
  %994 = vmatprep.subr.mxu0 0.0
  %995 = vmatpush1.msra.mxu0 %v789
  %996 = vmatprep.subr.mxu0 0.0
  %997 = vmatpush1.msra.mxu0 %v788
  %998 = vmatprep.subr.mxu0 0.0
  %999 = vmatpush1.msra.mxu0 %v787
  %1000 = vmatprep.subr.mxu0 0.0
  %1001 = vmatpush1.msra.mxu0 %v786
  %1002 = vmatprep.subr.mxu0 0.0
  %1003 = vmatpush1.msra.mxu0 %v785
  %1004 = vmatprep.subr.mxu0 0.0
  %1005 = vmatpush1.msra.mxu0 %v784
  %1006 = vmatprep.subr.mxu0 0.0
  %1007 = vmatpush1.msra.mxu0 %v783
  %1008 = vmatprep.subr.mxu0 0.0
  %1009 = vmatpush1.msra.mxu0 %v782
  %1010 = vmatprep.subr.mxu0 0.0
  %1011 = vmatpush1.msra.mxu0 %v781
  %1012 = vmatprep.subr.mxu0 0.0
  %1013 = vmatpush1.msra.mxu0 %v780
  %1014 = vmatprep.subr.mxu0 0.0
  %1015 = vmatpush2.msra.mxu0 0.0
  %1016 = vmatprep.subr.mxu0 0.0
  %1017 = vmatpush2.msra.mxu0 0.0
  %1018 = vmatprep.subr.mxu0 0.0
  %1019 = vmatpush2.msra.mxu0 0.0
  %1020 = vmatprep.subr.mxu0 0.0
  %1021 = vmatpush2.msra.mxu0 0.0
  %1022 = vmatprep.subr.mxu0 0.0
  %1023 = vmatpush2.msra.mxu0 0.0
  %1024 = vmatprep.subr.mxu0 0.0
  %1025 = vmatpush2.msra.mxu0 0.0
  %1026 = vmatprep.subr.mxu0 0.0
  %1027 = vmatpush2.msra.mxu0 0.0
  %1028 = vmatprep.subr.mxu0 0.0
  %1029 = vmatpush2.msra.mxu0 0.0
  %1030 = vmatprep.subr.mxu0 0.0
  %1031 = vmatpush2.msra.mxu0 0.0
  %1032 = vmatprep.subr.mxu0 0.0
  %1033 = vmatpush2.msra.mxu0 0.0
  %1034 = vmatprep.subr.mxu0 0.0
  %1035 = vmatpush2.msra.mxu0 0.0
  %1036 = vmatprep.subr.mxu0 0.0
  %1037 = vmatpush2.msra.mxu0 0.0
  %1038 = vmatprep.subr.mxu0 0.0
  %1039 = vmatpush2.msra.mxu0 0.0
  %1040 = vmatprep.subr.mxu0 0.0
  %1041 = vmatpush2.msra.mxu0 0.0
  %1042 = vmatprep.subr.mxu0 0.0
  %1043 = vmatpush2.msra.mxu0 0.0
  %1044 = vmatprep.subr.mxu0 0.0
  %1045 = vmatpush2.msra.mxu0 0.0
  %1046 = vmatprep.mubr.f32.mxu0 0.0
  %1047 = vmatmul.mubr.f32.gmra.mxu0 %v775
  %v1048 = vpop.f32.mrf.mxu0
  %v1049 = vadd.f32 %v964, %v1048
  %v1050 = vpop.f32.mrf.mxu0
  %1051 = vmatprep.mubr.f32.mxu0 0.0
  %1052 = vmatmul.mubr.f32.gmra.mxu0 %v776
  %v1053 = vpop.f32.mrf.mxu0
  %v1054 = vadd.f32 %v969, %v1053
  %v1055 = vpop.f32.mrf.mxu0
  %1056 = vmatprep.mubr.f32.mxu0 0.0
  %1057 = vmatmul.mubr.f32.gmra.mxu0 %v777
  %v1058 = vpop.f32.mrf.mxu0
  %v1059 = vadd.f32 %v974, %v1058
  %v1060 = vpop.f32.mrf.mxu0
  %1061 = vmatprep.mubr.f32.mxu0 0.0
  %1062 = vmatmul.mubr.f32.gmra.mxu0 %v778
  %v1063 = vpop.f32.mrf.mxu0
  %v1064 = vadd.f32 %v979, %v1063
  %v1065 = vpop.f32.mrf.mxu0
  %1066 = vdwg.mxu0
  %1067 = vmatprep.subr.mxu0 0.0
  %1068 = vmatpush1.msra.mxu0 0.0
  %1069 = vmatprep.subr.mxu0 0.0
  %1070 = vmatpush1.msra.mxu0 0.0
  %1071 = vmatprep.subr.mxu0 0.0
  %1072 = vmatpush1.msra.mxu0 0.0
  %1073 = vmatprep.subr.mxu0 0.0
  %1074 = vmatpush1.msra.mxu0 0.0
  %1075 = vmatprep.subr.mxu0 0.0
  %1076 = vmatpush1.msra.mxu0 0.0
  %1077 = vmatprep.subr.mxu0 0.0
  %1078 = vmatpush1.msra.mxu0 0.0
  %1079 = vmatprep.subr.mxu0 0.0
  %1080 = vmatpush1.msra.mxu0 0.0
  %1081 = vmatprep.subr.mxu0 0.0
  %1082 = vmatpush1.msra.mxu0 0.0
  %1083 = vmatprep.subr.mxu0 0.0
  %1084 = vmatpush1.msra.mxu0 0.0
  %1085 = vmatprep.subr.mxu0 0.0
  %1086 = vmatpush1.msra.mxu0 0.0
  %1087 = vmatprep.subr.mxu0 0.0
  %1088 = vmatpush1.msra.mxu0 0.0
  %1089 = vmatprep.subr.mxu0 0.0
  %1090 = vmatpush1.msra.mxu0 0.0
  %1091 = vmatprep.subr.mxu0 0.0
  %1092 = vmatpush1.msra.mxu0 %v778
  %1093 = vmatprep.subr.mxu0 0.0
  %1094 = vmatpush1.msra.mxu0 %v777
  %1095 = vmatprep.subr.mxu0 0.0
  %1096 = vmatpush1.msra.mxu0 %v776
  %1097 = vmatprep.subr.mxu0 0.0
  %1098 = vmatpush1.msra.mxu0 %v775
  %1099 = vmatprep.subr.mxu0 0.0
  %1100 = vmatpush2.msra.mxu0 0.0
  %1101 = vmatprep.subr.mxu0 0.0
  %1102 = vmatpush2.msra.mxu0 0.0
  %1103 = vmatprep.subr.mxu0 0.0
  %1104 = vmatpush2.msra.mxu0 0.0
  %1105 = vmatprep.subr.mxu0 0.0
  %1106 = vmatpush2.msra.mxu0 0.0
  %1107 = vmatprep.subr.mxu0 0.0
  %1108 = vmatpush2.msra.mxu0 0.0
  %1109 = vmatprep.subr.mxu0 0.0
  %1110 = vmatpush2.msra.mxu0 0.0
  %1111 = vmatprep.subr.mxu0 0.0
  %1112 = vmatpush2.msra.mxu0 0.0
  %1113 = vmatprep.subr.mxu0 0.0
  %1114 = vmatpush2.msra.mxu0 0.0
  %1115 = vmatprep.subr.mxu0 0.0
  %1116 = vmatpush2.msra.mxu0 0.0
  %1117 = vmatprep.subr.mxu0 0.0
  %1118 = vmatpush2.msra.mxu0 0.0
  %1119 = vmatprep.subr.mxu0 0.0
  %1120 = vmatpush2.msra.mxu0 0.0
  %1121 = vmatprep.subr.mxu0 0.0
  %1122 = vmatpush2.msra.mxu0 0.0
  %1123 = vmatprep.subr.mxu0 0.0
  %1124 = vmatpush2.msra.mxu0 0.0
  %1125 = vmatprep.subr.mxu0 0.0
  %1126 = vmatpush2.msra.mxu0 0.0
  %1127 = vmatprep.subr.mxu0 0.0
  %1128 = vmatpush2.msra.mxu0 0.0
  %1129 = vmatprep.subr.mxu0 0.0
  %1130 = vmatpush2.msra.mxu0 0.0
  %1131 = vmatprep.mubr.f32.mxu0 0.0
  %1132 = vmatmul.mubr.f32.gmra.mxu0 %v359
  %v1133 = vpop.f32.mrf.mxu0
  %v1134 = vadd.f32 0.0, %v1133
  %v1135 = vpop.f32.mrf.mxu0
  %1136 = vmatprep.mubr.f32.mxu0 0.0
  %1137 = vmatmul.mubr.f32.gmra.mxu0 %v362
  %v1138 = vpop.f32.mrf.mxu0
  %v1139 = vadd.f32 0.0, %v1138
  %v1140 = vpop.f32.mrf.mxu0
  %1141 = vmatprep.mubr.f32.mxu0 0.0
  %1142 = vmatmul.mubr.f32.gmra.mxu0 %v365
  %v1143 = vpop.f32.mrf.mxu0
  %v1144 = vadd.f32 0.0, %v1143
  %v1145 = vpop.f32.mrf.mxu0
  %1146 = vmatprep.mubr.f32.mxu0 0.0
  %1147 = vmatmul.mubr.f32.gmra.mxu0 %v368
  %v1148 = vpop.f32.mrf.mxu0
  %v1149 = vadd.f32 0.0, %v1148
  %v1150 = vpop.f32.mrf.mxu0
  %1151 = vdwg.mxu0
  %s1152 = scalar_lea.vmem %s6, 256
  %v1153 = vld [vmem:[%s1152] sm:$0xff]
  %v1154 = vld [vmem:[%s1152 + $0x8] sm:$0xff]
  %v1155 = vld [vmem:[%s1152 + $0x10] sm:$0xff]
  %v1156 = vld [vmem:[%s1152 + $0x18] sm:$0xff]
  %v1157 = vld [vmem:[%s1152 + $0x20] sm:$0xff]
  %v1158 = vld [vmem:[%s1152 + $0x28] sm:$0xff]
  %v1159 = vld [vmem:[%s1152 + $0x30] sm:$0xff]
  %v1160 = vld [vmem:[%s1152 + $0x38] sm:$0xff]
  %v1161 = vld [vmem:[%s1152 + $0x40] sm:$0xff]
  %v1162 = vld [vmem:[%s1152 + $0x48] sm:$0xff]
  %v1163 = vld [vmem:[%s1152 + $0x50] sm:$0xff]
  %v1164 = vld [vmem:[%s1152 + $0x58] sm:$0xff]
  %v1165 = vld [vmem:[%s1152 + $0x60] sm:$0xff]
  %v1166 = vld [vmem:[%s1152 + $0x68] sm:$0xff]
  %v1167 = vld [vmem:[%s1152 + $0x70] sm:$0xff]
  %v1168 = vld [vmem:[%s1152 + $0x78] sm:$0xff]
  %1169 = vmatprep.subr.mxu0 0.0
  %1170 = vmatpush1.msra.mxu0 %v1168
  %1171 = vmatprep.subr.mxu0 0.0
  %1172 = vmatpush1.msra.mxu0 %v1167
  %1173 = vmatprep.subr.mxu0 0.0
  %1174 = vmatpush1.msra.mxu0 %v1166
  %1175 = vmatprep.subr.mxu0 0.0
  %1176 = vmatpush1.msra.mxu0 %v1165
  %1177 = vmatprep.subr.mxu0 0.0
  %1178 = vmatpush1.msra.mxu0 %v1164
  %1179 = vmatprep.subr.mxu0 0.0
  %1180 = vmatpush1.msra.mxu0 %v1163
  %1181 = vmatprep.subr.mxu0 0.0
  %1182 = vmatpush1.msra.mxu0 %v1162
  %1183 = vmatprep.subr.mxu0 0.0
  %1184 = vmatpush1.msra.mxu0 %v1161
  %1185 = vmatprep.subr.mxu0 0.0
  %1186 = vmatpush1.msra.mxu0 %v1160
  %1187 = vmatprep.subr.mxu0 0.0
  %1188 = vmatpush1.msra.mxu0 %v1159
  %1189 = vmatprep.subr.mxu0 0.0
  %1190 = vmatpush1.msra.mxu0 %v1158
  %1191 = vmatprep.subr.mxu0 0.0
  %1192 = vmatpush1.msra.mxu0 %v1157
  %1193 = vmatprep.subr.mxu0 0.0
  %1194 = vmatpush1.msra.mxu0 %v1156
  %1195 = vmatprep.subr.mxu0 0.0
  %1196 = vmatpush1.msra.mxu0 %v1155
  %1197 = vmatprep.subr.mxu0 0.0
  %1198 = vmatpush1.msra.mxu0 %v1154
  %1199 = vmatprep.subr.mxu0 0.0
  %1200 = vmatpush1.msra.mxu0 %v1153
  %1201 = vmatprep.subr.mxu0 0.0
  %1202 = vmatpush2.msra.mxu0 0.0
  %1203 = vmatprep.subr.mxu0 0.0
  %1204 = vmatpush2.msra.mxu0 0.0
  %1205 = vmatprep.subr.mxu0 0.0
  %1206 = vmatpush2.msra.mxu0 0.0
  %1207 = vmatprep.subr.mxu0 0.0
  %1208 = vmatpush2.msra.mxu0 0.0
  %1209 = vmatprep.subr.mxu0 0.0
  %1210 = vmatpush2.msra.mxu0 0.0
  %1211 = vmatprep.subr.mxu0 0.0
  %1212 = vmatpush2.msra.mxu0 0.0
  %1213 = vmatprep.subr.mxu0 0.0
  %1214 = vmatpush2.msra.mxu0 0.0
  %1215 = vmatprep.subr.mxu0 0.0
  %1216 = vmatpush2.msra.mxu0 0.0
  %1217 = vmatprep.subr.mxu0 0.0
  %1218 = vmatpush2.msra.mxu0 0.0
  %1219 = vmatprep.subr.mxu0 0.0
  %1220 = vmatpush2.msra.mxu0 0.0
  %1221 = vmatprep.subr.mxu0 0.0
  %1222 = vmatpush2.msra.mxu0 0.0
  %1223 = vmatprep.subr.mxu0 0.0
  %1224 = vmatpush2.msra.mxu0 0.0
  %1225 = vmatprep.subr.mxu0 0.0
  %1226 = vmatpush2.msra.mxu0 0.0
  %1227 = vmatprep.subr.mxu0 0.0
  %1228 = vmatpush2.msra.mxu0 0.0
  %1229 = vmatprep.subr.mxu0 0.0
  %1230 = vmatpush2.msra.mxu0 0.0
  %1231 = vmatprep.subr.mxu0 0.0
  %1232 = vmatpush2.msra.mxu0 0.0
  %1233 = vmatprep.mubr.f32.mxu0 0.0
  %1234 = vmatmul.mubr.f32.gmra.mxu0 %v1134
  %v1235 = vpop.f32.mrf.mxu0
  %v1236 = vadd.f32 0.0, %v1235
  %v1237 = vpop.f32.mrf.mxu0
  %1238 = vmatprep.mubr.f32.mxu0 0.0
  %1239 = vmatmul.mubr.f32.gmra.mxu0 %v1139
  %v1240 = vpop.f32.mrf.mxu0
  %v1241 = vadd.f32 0.0, %v1240
  %v1242 = vpop.f32.mrf.mxu0
  %1243 = vmatprep.mubr.f32.mxu0 0.0
  %1244 = vmatmul.mubr.f32.gmra.mxu0 %v1144
  %v1245 = vpop.f32.mrf.mxu0
  %v1246 = vadd.f32 0.0, %v1245
  %v1247 = vpop.f32.mrf.mxu0
  %1248 = vmatprep.mubr.f32.mxu0 0.0
  %1249 = vmatmul.mubr.f32.gmra.mxu0 %v1149
  %v1250 = vpop.f32.mrf.mxu0
  %v1251 = vadd.f32 0.0, %v1250
  %v1252 = vpop.f32.mrf.mxu0
  %1253 = vdwg.mxu0
  %v1254 = vadd.f32 %v1049, %v1236
  %v1255 = vadd.f32 %v1054, %v1241
  %v1256 = vadd.f32 %v1059, %v1246
  %v1257 = vadd.f32 %v1064, %v1251
  %v1258 = vld [vmem:[%s7] sm:$0x1]
  %v1259 = vld [vmem:[%s8] sm:$0x1]
  %v1260 = vld [vmem:[%s9] sm:$0xff]
  %v1261 = vld [vmem:[%s9 + $0x8] sm:$0xff]
  %v1262 = vld [vmem:[%s9 + $0x10] sm:$0xff]
  %v1263 = vld [vmem:[%s9 + $0x18] sm:$0xff]
  %v1264 = vld [vmem:[%s9 + $0x20] sm:$0xff]
  %v1265 = vld [vmem:[%s9 + $0x28] sm:$0xff]
  %v1266 = vld [vmem:[%s9 + $0x30] sm:$0xff]
  %v1267 = vld [vmem:[%s9 + $0x38] sm:$0xff]
  %v1268 = vld [vmem:[%s9 + $0x40] sm:$0xff]
  %v1269 = vld [vmem:[%s9 + $0x48] sm:$0xff]
  %v1270 = vld [vmem:[%s9 + $0x50] sm:$0xff]
  %v1271 = vld [vmem:[%s9 + $0x58] sm:$0xff]
  %v1272 = vld [vmem:[%s9 + $0x60] sm:$0xff]
  %v1273 = vld [vmem:[%s9 + $0x68] sm:$0xff]
  %v1274 = vld [vmem:[%s9 + $0x70] sm:$0xff]
  %v1275 = vld [vmem:[%s9 + $0x78] sm:$0xff]
  %v1276 = vadd.f32 %v1254, %v1255
  %v1277 = vadd.f32 %v1276, %v1256
  %v1278 = vadd.f32 %v1277, %v1257
  %v1279 = vrot.slane %v1278, 4
  %v1280 = vadd.f32 %v1278, %v1279
  %v1281 = vrot.slane %v1280, 2
  %v1282 = vadd.f32 %v1280, %v1281
  %v1283 = vrot.slane %v1282, 1
  %v1284 = vadd.f32 %v1282, %v1283
  %1285 = vmatprep.subr.mxu0 0.0
  %1286 = vmatpush1.msra.mxu0 %v1275
  %1287 = vmatprep.subr.mxu0 0.0
  %1288 = vmatpush1.msra.mxu0 %v1274
  %1289 = vmatprep.subr.mxu0 0.0
  %1290 = vmatpush1.msra.mxu0 %v1273
  %1291 = vmatprep.subr.mxu0 0.0
  %1292 = vmatpush1.msra.mxu0 %v1272
  %1293 = vmatprep.subr.mxu0 0.0
  %1294 = vmatpush1.msra.mxu0 %v1271
  %1295 = vmatprep.subr.mxu0 0.0
  %1296 = vmatpush1.msra.mxu0 %v1270
  %1297 = vmatprep.subr.mxu0 0.0
  %1298 = vmatpush1.msra.mxu0 %v1269
  %1299 = vmatprep.subr.mxu0 0.0
  %1300 = vmatpush1.msra.mxu0 %v1268
  %1301 = vmatprep.subr.mxu0 0.0
  %1302 = vmatpush1.msra.mxu0 %v1267
  %1303 = vmatprep.subr.mxu0 0.0
  %1304 = vmatpush1.msra.mxu0 %v1266
  %1305 = vmatprep.subr.mxu0 0.0
  %1306 = vmatpush1.msra.mxu0 %v1265
  %1307 = vmatprep.subr.mxu0 0.0
  %1308 = vmatpush1.msra.mxu0 %v1264
  %1309 = vmatprep.subr.mxu0 0.0
  %1310 = vmatpush1.msra.mxu0 %v1263
  %1311 = vmatprep.subr.mxu0 0.0
  %1312 = vmatpush1.msra.mxu0 %v1262
  %1313 = vmatprep.subr.mxu0 0.0
  %1314 = vmatpush1.msra.mxu0 %v1261
  %1315 = vmatprep.subr.mxu0 0.0
  %1316 = vmatpush1.msra.mxu0 %v1260
  %1317 = vmatprep.subr.mxu0 0.0
  %1318 = vmatpush2.msra.mxu0 0.0
  %1319 = vmatprep.subr.mxu0 0.0
  %1320 = vmatpush2.msra.mxu0 0.0
  %1321 = vmatprep.subr.mxu0 0.0
  %1322 = vmatpush2.msra.mxu0 0.0
  %1323 = vmatprep.subr.mxu0 0.0
  %1324 = vmatpush2.msra.mxu0 0.0
  %1325 = vmatprep.subr.mxu0 0.0
  %1326 = vmatpush2.msra.mxu0 0.0
  %1327 = vmatprep.subr.mxu0 0.0
  %1328 = vmatpush2.msra.mxu0 0.0
  %1329 = vmatprep.subr.mxu0 0.0
  %1330 = vmatpush2.msra.mxu0 0.0
  %1331 = vmatprep.subr.mxu0 0.0
  %1332 = vmatpush2.msra.mxu0 0.0
  %1333 = vmatprep.subr.mxu0 0.0
  %1334 = vmatpush2.msra.mxu0 0.0
  %1335 = vmatprep.subr.mxu0 0.0
  %1336 = vmatpush2.msra.mxu0 0.0
  %1337 = vmatprep.subr.mxu0 0.0
  %1338 = vmatpush2.msra.mxu0 0.0
  %1339 = vmatprep.subr.mxu0 0.0
  %1340 = vmatpush2.msra.mxu0 0.0
  %1341 = vmatprep.subr.mxu0 0.0
  %1342 = vmatpush2.msra.mxu0 0.0
  %1343 = vmatprep.subr.mxu0 0.0
  %1344 = vmatpush2.msra.mxu0 0.0
  %1345 = vmatprep.subr.mxu0 0.0
  %1346 = vmatpush2.msra.mxu0 0.0
  %1347 = vmatprep.subr.mxu0 0.0
  %1348 = vmatpush2.msra.mxu0 0.0
  %1349 = vmatprep.mubr.f32.mxu0 0.0
  %1350 = vmatmul.mubr.f32.gmra.mxu0 %v1284
  %v1351 = vpop.f32.mrf.mxu0
  %v1352 = vadd.f32 0.0, %v1351
  %v1353 = vpop.f32.mrf.mxu0
  %1354 = vdwg.mxu0
  %v1355 = vlaneseq
  %v1356 = vshrl.u32 %v1355, 7
  %v1357 = vsub.s32 0, %v1356
  %v1358 = vrot.slane %v1352, %v1357
  %v1359 = vsub.f32 %v1254, %v1358
  %v1360 = vsub.f32 %v1255, %v1358
  %v1361 = vsub.f32 %v1256, %v1358
  %v1362 = vsub.f32 %v1257, %v1358
  %v1363 = vmul.f32 %v1359, %v1359
  %v1364 = vmul.f32 %v1360, %v1360
  %v1365 = vmul.f32 %v1361, %v1361
  %v1366 = vmul.f32 %v1362, %v1362
  %v1367 = vadd.f32 %v1363, %v1364
  %v1368 = vadd.f32 %v1367, %v1365
  %v1369 = vadd.f32 %v1368, %v1366
  %v1370 = vrot.slane %v1369, 4
  %v1371 = vadd.f32 %v1369, %v1370
  %v1372 = vrot.slane %v1371, 2
  %v1373 = vadd.f32 %v1371, %v1372
  %v1374 = vrot.slane %v1373, 1
  %v1375 = vadd.f32 %v1373, %v1374
  %1376 = vmatprep.subr.mxu0 0.0
  %1377 = vmatpush1.msra.mxu0 %v1275
  %1378 = vmatprep.subr.mxu0 0.0
  %1379 = vmatpush1.msra.mxu0 %v1274
  %1380 = vmatprep.subr.mxu0 0.0
  %1381 = vmatpush1.msra.mxu0 %v1273
  %1382 = vmatprep.subr.mxu0 0.0
  %1383 = vmatpush1.msra.mxu0 %v1272
  %1384 = vmatprep.subr.mxu0 0.0
  %1385 = vmatpush1.msra.mxu0 %v1271
  %1386 = vmatprep.subr.mxu0 0.0
  %1387 = vmatpush1.msra.mxu0 %v1270
  %1388 = vmatprep.subr.mxu0 0.0
  %1389 = vmatpush1.msra.mxu0 %v1269
  %1390 = vmatprep.subr.mxu0 0.0
  %1391 = vmatpush1.msra.mxu0 %v1268
  %1392 = vmatprep.subr.mxu0 0.0
  %1393 = vmatpush1.msra.mxu0 %v1267
  %1394 = vmatprep.subr.mxu0 0.0
  %1395 = vmatpush1.msra.mxu0 %v1266
  %1396 = vmatprep.subr.mxu0 0.0
  %1397 = vmatpush1.msra.mxu0 %v1265
  %1398 = vmatprep.subr.mxu0 0.0
  %1399 = vmatpush1.msra.mxu0 %v1264
  %1400 = vmatprep.subr.mxu0 0.0
  %1401 = vmatpush1.msra.mxu0 %v1263
  %1402 = vmatprep.subr.mxu0 0.0
  %1403 = vmatpush1.msra.mxu0 %v1262
  %1404 = vmatprep.subr.mxu0 0.0
  %1405 = vmatpush1.msra.mxu0 %v1261
  %1406 = vmatprep.subr.mxu0 0.0
  %1407 = vmatpush1.msra.mxu0 %v1260
  %1408 = vmatprep.subr.mxu0 0.0
  %1409 = vmatpush2.msra.mxu0 0.0
  %1410 = vmatprep.subr.mxu0 0.0
  %1411 = vmatpush2.msra.mxu0 0.0
  %1412 = vmatprep.subr.mxu0 0.0
  %1413 = vmatpush2.msra.mxu0 0.0
  %1414 = vmatprep.subr.mxu0 0.0
  %1415 = vmatpush2.msra.mxu0 0.0
  %1416 = vmatprep.subr.mxu0 0.0
  %1417 = vmatpush2.msra.mxu0 0.0
  %1418 = vmatprep.subr.mxu0 0.0
  %1419 = vmatpush2.msra.mxu0 0.0
  %1420 = vmatprep.subr.mxu0 0.0
  %1421 = vmatpush2.msra.mxu0 0.0
  %1422 = vmatprep.subr.mxu0 0.0
  %1423 = vmatpush2.msra.mxu0 0.0
  %1424 = vmatprep.subr.mxu0 0.0
  %1425 = vmatpush2.msra.mxu0 0.0
  %1426 = vmatprep.subr.mxu0 0.0
  %1427 = vmatpush2.msra.mxu0 0.0
  %1428 = vmatprep.subr.mxu0 0.0
  %1429 = vmatpush2.msra.mxu0 0.0
  %1430 = vmatprep.subr.mxu0 0.0
  %1431 = vmatpush2.msra.mxu0 0.0
  %1432 = vmatprep.subr.mxu0 0.0
  %1433 = vmatpush2.msra.mxu0 0.0
  %1434 = vmatprep.subr.mxu0 0.0
  %1435 = vmatpush2.msra.mxu0 0.0
  %1436 = vmatprep.subr.mxu0 0.0
  %1437 = vmatpush2.msra.mxu0 0.0
  %1438 = vmatprep.subr.mxu0 0.0
  %1439 = vmatpush2.msra.mxu0 0.0
  %1440 = vmatprep.mubr.f32.mxu0 0.0
  %1441 = vmatmul.mubr.f32.gmra.mxu0 %v1375
  %v1442 = vpop.f32.mrf.mxu0
  %v1443 = vadd.f32 1e-05, %v1442
  %v1444 = vpop.f32.mrf.mxu0
  %1445 = vdwg.mxu0
  %v1446 = vrsqrt.pop %v1443
  %v1447 = vmul.f32 %v1258, %v1446
  %v1449 = vlaneseq
  %v1450 = vshrl.u32 %v1449, 7
  %v1451 = vsub.s32 0, %v1450
  %v1452 = vrot.slane %v1447, %v1451
  %v1454 = vmul.f32 %v1359, %v1452
  %v1455 = vmul.f32 %v1360, %v1452
  %v1456 = vmul.f32 %v1361, %v1452
  %v1457 = vmul.f32 %v1362, %v1452
  %v1459 = vlaneseq
  %v1460 = vshrl.u32 %v1459, 7
  %v1461 = vsub.s32 0, %v1460
  %v1462 = vrot.slane %v1259, %v1461
  %v1464 = vadd.f32 %v1454, %v1462
  %v1465 = vadd.f32 %v1455, %v1462
  %v1466 = vadd.f32 %v1456, %v1462
  %v1467 = vadd.f32 %v1457, %v1462
  %v1468 = vmax.f32 %v1464, 0.0
  %v1469 = vmax.f32 %v1465, 0.0
  %v1470 = vmax.f32 %v1466, 0.0
  %v1471 = vmax.f32 %v1467, 0.0
  %1472 = vst [vmem:[%s10] sm:$0xff] %v1468
  %1473 = vst [vmem:[%s10 + $0x8] sm:$0xff] %v1469
  %1474 = vst [vmem:[%s10 + $0x10] sm:$0xff] %v1470
  %1475 = vst [vmem:[%s10 + $0x18] sm:$0xff] %v1471
  // Predicated region
  $region42: #{double_conv.1} parent=0 // pred_check
    _
  $region43: #{double_conv.1} parent=0 // pred_check_branch
    %1477 = sbr.rel (0) target = $region45
  $region44: #{double_conv.1} parent=0 // pred_region
    _
  $region45: #{double_conv.1} parent=0 // pred_fallthru
    _
  // Predicated region
  $region46: #{double_conv.1} parent=0 // pred_check
    _
  $region47: #{double_conv.1} parent=0 // pred_check_branch
    %1479 = sbr.rel (0) target = $region49
  $region48: #{double_conv.1} parent=0 // pred_region
    _
  $region49: #{double_conv.1} parent=0 // pred_fallthru
    _

</llo_original>
